<compile_context>
chip_gen: v5e
topology: v5e:2x2
jax: 0.10.0
libtpu: 0.0.40
codegen_flags: <defaults>
</compile_context>

<pallas_src>
import numpy as np
import jax
import jax.numpy as jnp
from jax import lax
from jax.experimental import pallas as pl
from jax.experimental.pallas import tpu as pltpu


# ---------------------------------------------------------------------------
# Pallas kernel: fused COND + UNCOND discriminator heads
# ---------------------------------------------------------------------------

def _heads_kernel(xh_ref, cc_ref, wh_ref, wc_ref, p_ref, pt_ref,
                  gamma_ref, beta_ref, w2c_ref, w2u_ref, bias_ref,
                  cond_ref, unc_ref):
    """Fused D_GET_LOGITS forward (conditional + unconditional).

    xh_ref   : (B, C_h*16)        f32  h_code, lane = c*16 + h*4 + w
    cc_ref   : (B, nef)           f32  sentence embedding
    wh_ref   : (C_h*16, C_out*16) bf16 conv3x3 folded over taps+positions (h part)
    wc_ref   : (nef,    C_out*16) bf16 conv3x3 folded (spatially-constant c part)
    p_ref    : (C_out*16, C_out)  f32  0/1 position-pooling matrix
    pt_ref   : (C_out, C_out*16)  f32  transpose (per-channel -> per-lane bcast)
    gamma_ref: (1, C_out)         f32  BatchNorm2d weight
    beta_ref : (1, C_out)         f32  BatchNorm2d bias
    w2c_ref  : (1, C_out*16)      f32  COND   outlogits Conv2d(C,1,4,4) weight
    w2u_ref  : (1, C_h*16)        f32  UNCOND outlogits Conv2d(C,1,4,4) weight
    bias_ref : (1, 2)             f32  SMEM: [cond bias, uncond bias]
    cond_ref : (B, 1)             f32  sigmoid(cond logits)
    unc_ref  : (B, 1)             f32  sigmoid(uncond logits)
    """
    bsz = xh_ref.shape[0]
    xh = xh_ref[...]                                            # (B, C_h*16) f32

    # ---- UNCOND head: Conv2d(C_h, 1, 4, 4) + bias -> sigmoid ------------
    zu = xh * w2u_ref[...]                                      # full-width VPU mul
    unc_ref[...] = jax.nn.sigmoid(
        jnp.sum(zu, axis=1, keepdims=True) + bias_ref[0, 1])

    # ---- COND head: conv3x3 -> BatchNorm(train stats) -> LeakyReLU(0.2)
    #                 -> Conv2d(C_out, 1, 4, 4) + bias -> sigmoid ---------
    # conv3x3(pad=1, no bias) as one stacked matmul (+ tiny c-code matmul).
    y = jnp.dot(xh.astype(jnp.bfloat16), wh_ref[...],
                preferred_element_type=jnp.float32)             # (B, C_out*16)
    y = y + jnp.dot(cc_ref[...].astype(jnp.bfloat16), wc_ref[...],
                    preferred_element_type=jnp.float32)

    # BatchNorm2d training statistics per channel over (batch, 4x4 positions).
    inv_cnt = 1.0 / (16.0 * bsz)
    s1 = jnp.sum(y, axis=0, keepdims=True)                      # (1, C_out*16)
    s2 = jnp.sum(y * y, axis=0, keepdims=True)
    mean_c = jnp.dot(s1, p_ref[...], preferred_element_type=jnp.float32) * inv_cnt
    ex2_c = jnp.dot(s2, p_ref[...], preferred_element_type=jnp.float32) * inv_cnt
    var_c = jnp.maximum(ex2_c - mean_c * mean_c, 0.0)           # clamp (review)
    inv_std = lax.rsqrt(var_c + 1e-5)
    scale_c = gamma_ref[...] * inv_std                          # (1, C_out)
    shift_c = beta_ref[...] - mean_c * scale_c
    scale_l = jnp.dot(scale_c, pt_ref[...], preferred_element_type=jnp.float32)
    shift_l = jnp.dot(shift_c, pt_ref[...], preferred_element_type=jnp.float32)
    y = y * scale_l + shift_l                                   # normalize (f32)
    y = jnp.where(y > 0.0, y, 0.2 * y)                          # LeakyReLU(0.2)

    zc = y * w2c_ref[...]
    cond_ref[...] = jax.nn.sigmoid(
        jnp.sum(zc, axis=1, keepdims=True) + bias_ref[0, 0])


# ---------------------------------------------------------------------------
# One-time parameter preparation (hoisted out of the forward pass — review 5)
# ---------------------------------------------------------------------------

def prepare_params(raw, *, ndf, nef):
    """Fold PyTorch-shaped parameters into kernel layouts.  Call once."""
    C_h = ndf * 8
    w1 = np.asarray(raw["w1"], np.float32)                 # (C_out, C_h+nef, 3, 3)
    C_out = w1.shape[0]
    assert w1.shape[1] == C_h + nef

    # conv3x3(pad=1) folded over taps and the 4x4 output positions:
    #   wh[ci*16 + p_in, co*16 + p_out] = w1[co, ci, h_in-h_out+1, w_in-w_out+1]
    #   wc[cj,           co*16 + p_out] = sum_{valid taps at p_out} w1[co, C_h+cj, kh, kw]
    wh = np.zeros((C_h, 16, C_out, 16), np.float32)
    wc = np.zeros((nef, C_out, 16), np.float32)
    for ho in range(4):
        for wo in range(4):
            po = ho * 4 + wo
            for kh in range(3):
                for kw in range(3):
                    hi, wi = ho + kh - 1, wo + kw - 1
                    if 0 <= hi < 4 and 0 <= wi < 4:
                        pi = hi * 4 + wi
                        wh[:, pi, :, po] = w1[:, :C_h, kh, kw].T
                        wc[:, :, po] += w1[:, C_h:, kh, kw].T
    wh = wh.reshape(C_h * 16, C_out * 16)
    wc = wc.reshape(nef, C_out * 16)

    # 0/1 position-pooling matrix: sums the 16 lanes of each channel block.
    pool = np.zeros((C_out * 16, C_out), np.float32)
    pool[np.arange(C_out * 16), np.arange(C_out * 16) // 16] = 1.0

    b2c = float(np.asarray(raw["b2_c"]).reshape(()))
    b2u = float(np.asarray(raw["b2_u"]).reshape(()))
    return {
        "wh": jnp.asarray(wh, jnp.bfloat16),
        "wc": jnp.asarray(wc, jnp.bfloat16),
        "pool": jnp.asarray(pool, jnp.float32),
        "poolT": jnp.asarray(np.ascontiguousarray(pool.T), jnp.float32),
        "gamma": jnp.asarray(np.asarray(raw["gamma"], np.float32).reshape(1, C_out)),
        "beta": jnp.asarray(np.asarray(raw["beta"], np.float32).reshape(1, C_out)),
        "w2c": jnp.asarray(np.asarray(raw["w2_c"], np.float32).reshape(1, C_out * 16)),
        "w2u": jnp.asarray(np.asarray(raw["w2_u"], np.float32).reshape(1, C_h * 16)),
        "bias": jnp.asarray(np.array([[b2c, b2u]], np.float32)),
    }


# ---------------------------------------------------------------------------
# Forward wrapper (one pallas_call for both heads — review 7)
# ---------------------------------------------------------------------------

def d_net64_heads(h_code, c_code, prep):
    """COND_DNET(h_code, c_code) and UNCOND_DNET(h_code).  Returns ((B,), (B,))."""
    B, C_h, H, W = h_code.shape
    assert (H, W) == (4, 4)
    xh = h_code.reshape(B, C_h * 16)   # free layout change; lane = c*16 + h*4 + w

    vmem = pl.BlockSpec(memory_space=pltpu.MemorySpace.VMEM)
    smem = pl.BlockSpec(memory_space=pltpu.MemorySpace.SMEM)
    cond, unc = pl.pallas_call(
        _heads_kernel,
        out_shape=(jax.ShapeDtypeStruct((B, 1), jnp.float32),
                   jax.ShapeDtypeStruct((B, 1), jnp.float32)),
        in_specs=[vmem, vmem, vmem, vmem, vmem, vmem,
                  vmem, vmem, vmem, vmem, smem],
        out_specs=(vmem, vmem),
    )(xh, c_code, prep["wh"], prep["wc"], prep["pool"], prep["poolT"],
      prep["gamma"], prep["beta"], prep["w2c"], prep["w2u"], prep["bias"])
    return cond.reshape(-1), unc.reshape(-1)


# ---------------------------------------------------------------------------
# Pure-JAX reference (mirrors the PyTorch module, training-mode BatchNorm)
# ---------------------------------------------------------------------------

def reference_heads(h_code, c_code, raw):
    B, nef = c_code.shape
    dn = ("NCHW", "OIHW", "NCHW")
    # COND_DNET: cat(h, c.repeat(1,1,4,4)) -> conv3x3 -> BN -> LeakyReLU -> 4x4 conv
    c = jnp.broadcast_to(c_code[:, :, None, None], (B, nef, 4, 4))
    x = jnp.concatenate([h_code, c], axis=1)
    y = lax.conv_general_dilated(x, raw["w1"], (1, 1), ((1, 1), (1, 1)),
                                 dimension_numbers=dn,
                                 precision=lax.Precision.HIGHEST)
    mean = jnp.mean(y, axis=(0, 2, 3), keepdims=True)
    var = jnp.mean(jnp.square(y - mean), axis=(0, 2, 3), keepdims=True)
    y = (y - mean) / jnp.sqrt(var + 1e-5)
    y = y * raw["gamma"][None, :, None, None] + raw["beta"][None, :, None, None]
    y = jnp.where(y > 0.0, y, 0.2 * y)
    cond = lax.conv_general_dilated(y, raw["w2_c"], (4, 4), "VALID",
                                    dimension_numbers=dn,
                                    precision=lax.Precision.HIGHEST)
    cond = jax.nn.sigmoid(cond + raw["b2_c"][None, :, None, None]).reshape(-1)
    # UNCOND_DNET: 4x4 conv on h_code directly
    unc = lax.conv_general_dilated(h_code, raw["w2_u"], (4, 4), "VALID",
                                   dimension_numbers=dn,
                                   precision=lax.Precision.HIGHEST)
    unc = jax.nn.sigmoid(unc + raw["b2_u"][None, :, None, None]).reshape(-1)
    return cond, unc


# ---------------------------------------------------------------------------
# Main
# ---------------------------------------------------------------------------

if __name__ == "__main__":
    ndf, nef, B = 4, 8, 2
    C_h = ndf * 8            # 32 (backbone output channels = D_GET_LOGITS input)
    C_in = C_h + nef         # 40 (conditional jointConv input channels)
    C_out = C_h              # 32 (jointConv output channels)

    key = jax.random.PRNGKey(0)
    ks = jax.random.split(key, 9)

    # Parameters shaped exactly like the PyTorch module.
    raw = {
        # jointConv = conv3x3(no bias) + BatchNorm2d + LeakyReLU(0.2)
        "w1": jax.random.normal(ks[0], (C_out, C_in, 3, 3), jnp.float32) * 0.05,
        "gamma": 1.0 + 0.1 * jax.random.normal(ks[1], (C_out,), jnp.float32),
        "beta": 0.1 * jax.random.normal(ks[2], (C_out,), jnp.float32),
        # COND_DNET.outlogits / UNCOND_DNET.outlogits: Conv2d(ndf*8, 1, 4, 4)
        "w2_c": jax.random.normal(ks[3], (1, C_out, 4, 4), jnp.float32) * 0.05,
        "b2_c": jax.random.normal(ks[4], (1,), jnp.float32) * 0.05,
        "w2_u": jax.random.normal(ks[5], (1, C_h, 4, 4), jnp.float32) * 0.05,
        "b2_u": jax.random.normal(ks[6], (1,), jnp.float32) * 0.05,
    }

    h_code = jax.random.normal(ks[7], (B, C_h, 4, 4), jnp.float32)
    c_code = jax.random.normal(ks[8], (B, nef), jnp.float32)

    prep = prepare_params(raw, ndf=ndf, nef=nef)   # once, not per forward
    fwd = jax.jit(d_net64_heads)

    cond, unc = fwd(h_code, c_code, prep)
    cond, unc = jax.block_until_ready((cond, unc))

    ref_cond, ref_unc = reference_heads(h_code, c_code, raw)

    assert cond.shape == (B,) and unc.shape == (B,)
    # Conv path uses bf16 MXU operands -> looser tolerance; uncond path is f32.
    assert jnp.allclose(cond, ref_cond, atol=1e-2, rtol=1e-2), (cond, ref_cond)
    assert jnp.allclose(unc, ref_unc, atol=1e-3, rtol=1e-3), (unc, ref_unc)

    print("KERNEL_OK")
</pallas_src>

<mosaic_0001>
module attributes {stable_mosaic.version = 11 : i64} {
  func.func @_heads_kernel(%arg0: memref<2x512xf32, #tpu.memory_space<vmem>>, %arg1: memref<2x8xf32, #tpu.memory_space<vmem>>, %arg2: memref<512x512xbf16, #tpu.memory_space<vmem>>, %arg3: memref<8x512xbf16, #tpu.memory_space<vmem>>, %arg4: memref<512x32xf32, #tpu.memory_space<vmem>>, %arg5: memref<32x512xf32, #tpu.memory_space<vmem>>, %arg6: memref<1x32xf32, #tpu.memory_space<vmem>>, %arg7: memref<1x32xf32, #tpu.memory_space<vmem>>, %arg8: memref<1x512xf32, #tpu.memory_space<vmem>>, %arg9: memref<1x512xf32, #tpu.memory_space<vmem>>, %arg10: memref<1x2xf32, #tpu.memory_space<smem>>, %arg11: memref<2x1xf32, #tpu.memory_space<vmem>>, %arg12: memref<2x1xf32, #tpu.memory_space<vmem>>) attributes {dimension_semantics = [], scalar_prefetch = 0 : i64, scratch_operands = 0 : i64, tpu.core_type = #tpu.core_type<tc>} {
    %c0 = arith.constant 0 : index
    %c0_0 = arith.constant 0 : index
    %0 = vector.load %arg0[%c0, %c0_0] : memref<2x512xf32, #tpu.memory_space<vmem>>, vector<2x512xf32>
    %c0_1 = arith.constant 0 : index
    %c0_2 = arith.constant 0 : index
    %1 = vector.load %arg9[%c0_1, %c0_2] : memref<1x512xf32, #tpu.memory_space<vmem>>, vector<1x512xf32>
    %2 = vector.broadcast %1 : vector<1x512xf32> to vector<2x512xf32>
    %3 = arith.mulf %0, %2 : vector<2x512xf32>
    %cst = arith.constant dense<0.000000e+00> : vector<2xf32>
    %4 = vector.multi_reduction <add>, %3, %cst [1] : vector<2x512xf32> to vector<2xf32>
    %5 = vector.shape_cast %4 : vector<2xf32> to vector<2x1xf32>
    %c0_3 = arith.constant 0 : index
    %c1 = arith.constant 1 : index
    %6 = memref.load %arg10[%c0_3, %c1] : memref<1x2xf32, #tpu.memory_space<smem>>
    %7 = vector.broadcast %6 : f32 to vector<2x1xf32>
    %8 = arith.addf %5, %7 : vector<2x1xf32>
    %9 = arith.negf %8 : vector<2x1xf32>
    %10 = math.exp %9 : vector<2x1xf32>
    %cst_4 = arith.constant 1.000000e+00 : f32
    %11 = vector.broadcast %cst_4 : f32 to vector<2x1xf32>
    %12 = arith.addf %11, %10 : vector<2x1xf32>
    %13 = arith.divf %11, %12 : vector<2x1xf32>
    %c0_5 = arith.constant 0 : index
    %c0_6 = arith.constant 0 : index
    %14 = vector.load %arg12[%c0_5, %c0_6] : memref<2x1xf32, #tpu.memory_space<vmem>>, vector<2x1xf32>
    tpu.vector_store %arg12[%c0_5, %c0_6], %13 {strides = array<i32>} : memref<2x1xf32, #tpu.memory_space<vmem>>, vector<2x1xf32>,
    %15 = arith.truncf %0 : vector<2x512xf32> to vector<2x512xbf16>
    %c0_7 = arith.constant 0 : index
    %c0_8 = arith.constant 0 : index
    %16 = vector.load %arg2[%c0_7, %c0_8] : memref<512x512xbf16, #tpu.memory_space<vmem>>, vector<512x512xbf16>
    %cst_9 = arith.constant dense<0.000000e+00> : vector<2x512xf32>
    %17 = tpu.matmul %15, %16, %cst_9 {dimension_numbers = #tpu.dot_dimension_numbers<[1], [0], [0], [1], [0, 0, 1, 1], [], []>} : vector<2x512xbf16>, vector<512x512xbf16>, vector<2x512xf32> -> vector<2x512xf32>
    %c0_10 = arith.constant 0 : index
    %c0_11 = arith.constant 0 : index
    %18 = vector.load %arg1[%c0_10, %c0_11] : memref<2x8xf32, #tpu.memory_space<vmem>>, vector<2x8xf32>
    %19 = arith.truncf %18 : vector<2x8xf32> to vector<2x8xbf16>
    %c0_12 = arith.constant 0 : index
    %c0_13 = arith.constant 0 : index
    %20 = vector.load %arg3[%c0_12, %c0_13] : memref<8x512xbf16, #tpu.memory_space<vmem>>, vector<8x512xbf16>
    %cst_14 = arith.constant dense<0.000000e+00> : vector<2x512xf32>
    %21 = tpu.matmul %19, %20, %cst_14 {dimension_numbers = #tpu.dot_dimension_numbers<[1], [0], [0], [1], [0, 0, 1, 1], [], []>} : vector<2x8xbf16>, vector<8x512xbf16>, vector<2x512xf32> -> vector<2x512xf32>
    %22 = arith.addf %17, %21 : vector<2x512xf32>
    %cst_15 = arith.constant dense<0.000000e+00> : vector<512xf32>
    %23 = vector.multi_reduction <add>, %22, %cst_15 [0] : vector<2x512xf32> to vector<512xf32>
    %24 = vector.shape_cast %23 : vector<512xf32> to vector<1x512xf32>
    %25 = arith.mulf %22, %22 : vector<2x512xf32>
    %cst_16 = arith.constant dense<0.000000e+00> : vector<512xf32>
    %26 = vector.multi_reduction <add>, %25, %cst_16 [0] : vector<2x512xf32> to vector<512xf32>
    %27 = vector.shape_cast %26 : vector<512xf32> to vector<1x512xf32>
    %c0_17 = arith.constant 0 : index
    %c0_18 = arith.constant 0 : index
    %28 = vector.load %arg4[%c0_17, %c0_18] : memref<512x32xf32, #tpu.memory_space<vmem>>, vector<512x32xf32>
    %cst_19 = arith.constant dense<0.000000e+00> : vector<1x32xf32>
    %29 = tpu.matmul %24, %28, %cst_19 {dimension_numbers = #tpu.dot_dimension_numbers<[1], [0], [0], [1], [0, 0, 1, 1], [], []>} : vector<1x512xf32>, vector<512x32xf32>, vector<1x32xf32> -> vector<1x32xf32>
    %cst_20 = arith.constant 3.125000e-02 : f32
    %30 = vector.broadcast %cst_20 : f32 to vector<1x32xf32>
    %31 = arith.mulf %29, %30 : vector<1x32xf32>
    %c0_21 = arith.constant 0 : index
    %c0_22 = arith.constant 0 : index
    %32 = vector.load %arg4[%c0_21, %c0_22] : memref<512x32xf32, #tpu.memory_space<vmem>>, vector<512x32xf32>
    %cst_23 = arith.constant dense<0.000000e+00> : vector<1x32xf32>
    %33 = tpu.matmul %27, %32, %cst_23 {dimension_numbers = #tpu.dot_dimension_numbers<[1], [0], [0], [1], [0, 0, 1, 1], [], []>} : vector<1x512xf32>, vector<512x32xf32>, vector<1x32xf32> -> vector<1x32xf32>
    %cst_24 = arith.constant 3.125000e-02 : f32
    %34 = vector.broadcast %cst_24 : f32 to vector<1x32xf32>
    %35 = arith.mulf %33, %34 : vector<1x32xf32>
    %36 = arith.mulf %31, %31 : vector<1x32xf32>
    %37 = arith.subf %35, %36 : vector<1x32xf32>
    %cst_25 = arith.constant 0.000000e+00 : f32
    %38 = vector.broadcast %cst_25 : f32 to vector<1x32xf32>
    %39 = arith.maximumf %37, %38 : vector<1x32xf32>
    %cst_26 = arith.constant 9.99999974E-6 : f32
    %40 = vector.broadcast %cst_26 : f32 to vector<1x32xf32>
    %41 = arith.addf %39, %40 : vector<1x32xf32>
    %42 = math.rsqrt %41 : vector<1x32xf32>
    %c0_27 = arith.constant 0 : index
    %c0_28 = arith.constant 0 : index
    %43 = vector.load %arg6[%c0_27, %c0_28] : memref<1x32xf32, #tpu.memory_space<vmem>>, vector<1x32xf32>
    %44 = arith.mulf %43, %42 : vector<1x32xf32>
    %c0_29 = arith.constant 0 : index
    %c0_30 = arith.constant 0 : index
    %45 = vector.load %arg7[%c0_29, %c0_30] : memref<1x32xf32, #tpu.memory_space<vmem>>, vector<1x32xf32>
    %46 = arith.mulf %31, %44 : vector<1x32xf32>
    %47 = arith.subf %45, %46 : vector<1x32xf32>
    %c0_31 = arith.constant 0 : index
    %c0_32 = arith.constant 0 : index
    %48 = vector.load %arg5[%c0_31, %c0_32] : memref<32x512xf32, #tpu.memory_space<vmem>>, vector<32x512xf32>
    %cst_33 = arith.constant dense<0.000000e+00> : vector<1x512xf32>
    %49 = tpu.matmul %44, %48, %cst_33 {dimension_numbers = #tpu.dot_dimension_numbers<[1], [0], [0], [1], [0, 0, 1, 1], [], []>} : vector<1x32xf32>, vector<32x512xf32>, vector<1x512xf32> -> vector<1x512xf32>
    %c0_34 = arith.constant 0 : index
    %c0_35 = arith.constant 0 : index
    %50 = vector.load %arg5[%c0_34, %c0_35] : memref<32x512xf32, #tpu.memory_space<vmem>>, vector<32x512xf32>
    %cst_36 = arith.constant dense<0.000000e+00> : vector<1x512xf32>
    %51 = tpu.matmul %47, %50, %cst_36 {dimension_numbers = #tpu.dot_dimension_numbers<[1], [0], [0], [1], [0, 0, 1, 1], [], []>} : vector<1x32xf32>, vector<32x512xf32>, vector<1x512xf32> -> vector<1x512xf32>
    %52 = vector.broadcast %49 : vector<1x512xf32> to vector<2x512xf32>
    %53 = arith.mulf %22, %52 : vector<2x512xf32>
    %54 = vector.broadcast %51 : vector<1x512xf32> to vector<2x512xf32>
    %55 = arith.addf %53, %54 : vector<2x512xf32>
    %cst_37 = arith.constant 0.000000e+00 : f32
    %56 = vector.broadcast %cst_37 : f32 to vector<2x512xf32>
    %57 = arith.cmpf ogt, %55, %56 : vector<2x512xf32>
    %cst_38 = arith.constant 2.000000e-01 : f32
    %58 = vector.broadcast %cst_38 : f32 to vector<2x512xf32>
    %59 = arith.mulf %58, %55 : vector<2x512xf32>
    %60 = arith.select %57, %55, %59 : vector<2x512xi1>, vector<2x512xf32>
    %c0_39 = arith.constant 0 : index
    %c0_40 = arith.constant 0 : index
    %61 = vector.load %arg8[%c0_39, %c0_40] : memref<1x512xf32, #tpu.memory_space<vmem>>, vector<1x512xf32>
    %62 = vector.broadcast %61 : vector<1x512xf32> to vector<2x512xf32>
    %63 = arith.mulf %60, %62 : vector<2x512xf32>
    %cst_41 = arith.constant dense<0.000000e+00> : vector<2xf32>
    %64 = vector.multi_reduction <add>, %63, %cst_41 [1] : vector<2x512xf32> to vector<2xf32>
    %65 = vector.shape_cast %64 : vector<2xf32> to vector<2x1xf32>
    %c0_42 = arith.constant 0 : index
    %c0_43 = arith.constant 0 : index
    %66 = memref.load %arg10[%c0_42, %c0_43] : memref<1x2xf32, #tpu.memory_space<smem>>
    %67 = vector.broadcast %66 : f32 to vector<2x1xf32>
    %68 = arith.addf %65, %67 : vector<2x1xf32>
    %69 = arith.negf %68 : vector<2x1xf32>
    %70 = math.exp %69 : vector<2x1xf32>
    %cst_44 = arith.constant 1.000000e+00 : f32
    %71 = vector.broadcast %cst_44 : f32 to vector<2x1xf32>
    %72 = arith.addf %71, %70 : vector<2x1xf32>
    %73 = arith.divf %71, %72 : vector<2x1xf32>
    %c0_45 = arith.constant 0 : index
    %c0_46 = arith.constant 0 : index
    %74 = vector.load %arg11[%c0_45, %c0_46] : memref<2x1xf32, #tpu.memory_space<vmem>>, vector<2x1xf32>
    tpu.vector_store %arg11[%c0_45, %c0_46], %73 {strides = array<i32>} : memref<2x1xf32, #tpu.memory_space<vmem>>, vector<2x1xf32>,
    return
  }
}

</mosaic_0001>

<llo_original>
// kernel: d_net64_heads.1
$region0: #{d_net64_heads.1}
  #allocation0 [shape = 'u32[]', space=smem, size = 0x4, offset = 0x4, fixed_abs, tag = 'smem constant byte address 0x4 - core index']
  #allocation1 [shape = 'u32[72,128]{1,0:T(1,128)}', space=vmem, size = 0x9000, scoped, tag = 'internal scratch']
  %s0 = inlined_call_operand.vmem [shape: f32[2,512], index: 0, kind: input, shape index: {}]
  %s1 = inlined_call_operand.vmem [shape: f32[2,8], index: 1, kind: input, shape index: {}]
  %s2 = inlined_call_operand.hbm [shape: bf16[512,512], index: 2, kind: input, shape index: {}]
  %s3 = inlined_call_operand.vmem [shape: bf16[8,512], index: 3, kind: input, shape index: {}]
  %s4 = inlined_call_operand.vmem [shape: f32[512,32], index: 4, kind: input, shape index: {}]
  %s5 = inlined_call_operand.vmem [shape: f32[32,512], index: 5, kind: input, shape index: {}]
  %s6 = inlined_call_operand.vmem [shape: f32[1,32], index: 6, kind: input, shape index: {}]
  %s7 = inlined_call_operand.vmem [shape: f32[1,32], index: 7, kind: input, shape index: {}]
  %s8 = inlined_call_operand.vmem [shape: f32[1,512], index: 8, kind: input, shape index: {}]
  %s9 = inlined_call_operand.vmem [shape: f32[1,512], index: 9, kind: input, shape index: {}]
  %s10 = inlined_call_operand.vmem [shape: f32[1,2], index: 10, kind: input, shape index: {}]
  %s11 = inlined_call_operand.vmem [shape: f32[2,1], index: 11, kind: output, shape index: {0}]
  %s12 = inlined_call_operand.vmem [shape: f32[2,1], index: 12, kind: output, shape index: {1}]
  %13 = xla_tuple %s11, %s12
  %s14 = sld [smem:[#allocation0]]
  $region70: #{d_net64_heads.1} parent=0
    _
  %s16 = ssub.s32 1, %s14
  %s17 = scalar_select 0, %s16, %s14
  $region1: #{d_net64_heads.1} parent=0
    #allocation2 [shape = 'u8[524288]{0}', space=vmem, size = 0x80000, scoped, tag = 'input window, operand 2, single buffered']
    #allocation3 [shape = 's32[1]{0}', space=sflag, size = 0x4, scoped, tag = 'scoped memory for d_net64_heads.1']
    #allocation4 [shape = 's32[1]{0}', space=sflag, size = 0x4, scoped, tag = 'scoped memory for d_net64_heads.1']
    #allocation5 [shape = 'u8[512]{0}', space=smem, size = 0x200, scoped, tag = 'input window, operand 10, single buffered']
    %18 = vsyncpa [#allocation3], 0
    %19 = vsyncpa [#allocation4], 0
    // Predicated region
    $region2: #{d_net64_heads.1} parent=1 // pred_check
      _
    $region3: #{d_net64_heads.1} parent=1 // pred_check_branch
      %21 = sbr.rel (0) target = $region5
    $region4: #{d_net64_heads.1} parent=1 // pred_region
      _
    $region5: #{d_net64_heads.1} parent=1 // pred_fallthru
      _
    // Predicated region
    $region6: #{d_net64_heads.1} parent=1 // pred_check
      _
    $region7: #{d_net64_heads.1} parent=1 // pred_check_branch
      %23 = sbr.rel (0) target = $region9
    $region8: #{d_net64_heads.1} parent=1 // pred_region
      _
    $region9: #{d_net64_heads.1} parent=1 // pred_fallthru
      _
    // Predicated region
    $region10: #{d_net64_heads.1} parent=1 // pred_check
      _
    $region11: #{d_net64_heads.1} parent=1 // pred_check_branch
      %25 = sbr.rel (0) target = $region13
    $region12: #{d_net64_heads.1} parent=1 // pred_region
      %27 = vsyncadd [#allocation3], 0
      %s28 = sshll.u32 %s2, 4
      %s29 = int_to_ptr.hbm [resolvable:$true] %s28
      %s30 = sshll.u32 [#allocation2], 4
      %s31 = int_to_ptr.vmem [resolvable:$true] %s30
      %36 = dma.hbm_to_vmem [thread:$0]  %s29, 16384, %s31, [#allocation3], 256, 256, 16
    $region13: #{d_net64_heads.1} parent=1 // pred_fallthru
      _
    // Predicated region
    $region14: #{d_net64_heads.1} parent=1 // pred_check
      _
    $region15: #{d_net64_heads.1} parent=1 // pred_check_branch
      %38 = sbr.rel (0) target = $region17
    $region16: #{d_net64_heads.1} parent=1 // pred_region
      _
    $region17: #{d_net64_heads.1} parent=1 // pred_fallthru
      _
    // Predicated region
    $region18: #{d_net64_heads.1} parent=1 // pred_check
      _
    $region19: #{d_net64_heads.1} parent=1 // pred_check_branch
      %40 = sbr.rel (0) target = $region21
    $region20: #{d_net64_heads.1} parent=1 // pred_region
      _
    $region21: #{d_net64_heads.1} parent=1 // pred_fallthru
      _
    // Predicated region
    $region22: #{d_net64_heads.1} parent=1 // pred_check
      _
    $region23: #{d_net64_heads.1} parent=1 // pred_check_branch
      %42 = sbr.rel (0) target = $region25
    $region24: #{d_net64_heads.1} parent=1 // pred_region
      _
    $region25: #{d_net64_heads.1} parent=1 // pred_fallthru
      _
    // Predicated region
    $region26: #{d_net64_heads.1} parent=1 // pred_check
      _
    $region27: #{d_net64_heads.1} parent=1 // pred_check_branch
      %44 = sbr.rel (0) target = $region29
    $region28: #{d_net64_heads.1} parent=1 // pred_region
      _
    $region29: #{d_net64_heads.1} parent=1 // pred_fallthru
      _
    // Predicated region
    $region30: #{d_net64_heads.1} parent=1 // pred_check
      _
    $region31: #{d_net64_heads.1} parent=1 // pred_check_branch
      %46 = sbr.rel (0) target = $region33
    $region32: #{d_net64_heads.1} parent=1 // pred_region
      _
    $region33: #{d_net64_heads.1} parent=1 // pred_fallthru
      _
    // Predicated region
    $region34: #{d_net64_heads.1} parent=1 // pred_check
      _
    $region35: #{d_net64_heads.1} parent=1 // pred_check_branch
      %48 = sbr.rel (0) target = $region37
    $region36: #{d_net64_heads.1} parent=1 // pred_region
      _
    $region37: #{d_net64_heads.1} parent=1 // pred_fallthru
      _
    // Predicated region
    $region38: #{d_net64_heads.1} parent=1 // pred_check
      _
    $region39: #{d_net64_heads.1} parent=1 // pred_check_branch
      %50 = sbr.rel (0) target = $region41
    $region40: #{d_net64_heads.1} parent=1 // pred_region
      _
    $region41: #{d_net64_heads.1} parent=1 // pred_fallthru
      _
    // Predicated region
    $region42: #{d_net64_heads.1} parent=1 // pred_check
      _
    $region43: #{d_net64_heads.1} parent=1 // pred_check_branch
      %52 = sbr.rel (0) target = $region45
    $region44: #{d_net64_heads.1} parent=1 // pred_region
      %54 = vsyncadd [#allocation4], 0
      %s56 = sshll.u32 %s10, 4
      %s57 = int_to_ptr.vmem [resolvable:$true] %s56
      %59 = dma.vmem_to_smem %s57, 16, [#allocation5], [#allocation4]
    $region45: #{d_net64_heads.1} parent=1 // pred_fallthru
      _
    // Predicated region
    $region46: #{d_net64_heads.1} parent=1 // pred_check
      _
    $region47: #{d_net64_heads.1} parent=1 // pred_check_branch
      %61 = sbr.rel (0) target = $region49
    $region48: #{d_net64_heads.1} parent=1 // pred_region
      %63 = dma.done [#allocation3], 16384
    $region49: #{d_net64_heads.1} parent=1 // pred_fallthru
      _
    // Predicated region
    $region50: #{d_net64_heads.1} parent=1 // pred_check
      _
    $region51: #{d_net64_heads.1} parent=1 // pred_check_branch
      %65 = sbr.rel (0) target = $region53
    $region52: #{d_net64_heads.1} parent=1 // pred_region
      %67 = dma.done [#allocation4], 16
    $region53: #{d_net64_heads.1} parent=1 // pred_fallthru
      _
    %68 = sfence
    %v70 = vld [vmem:[%s0] sm:$0xff]
    %v71 = vld [vmem:[%s9] sm:$0xf]
    %v73 = vperm.slane %v71, 0
    %v74 = vperm.slane %v71, 1
    %v75 = vperm.slane %v71, 2
    %v76 = vperm.slane %v71, 3
    %v77 = vrot.slane %v74, 6
    %v78 = vrot.slane %v75, 4
    %v79 = vrot.slane %v76, 2
    %vm80 = vcmask 1041408
    %v81 = vsel %vm80, %v73, %v77
    %vm82 = vcmask 1045508
    %v83 = vsel %vm82, %v78, %v79
    %vm84 = vcmask 1043456
    %v85 = vsel %vm84, %v81, %v83
    %v87 = vmul.f32 %v70, %v85
    %89 = vst [vmem:[#allocation1] ss:$4 sm:$0xff] %v87
    %v90 = vld.sshfl [vmem:[#allocation1] sm:$0xff pattern:$0x73625140]
    %v91 = vld.sshfl [vmem:[#allocation1 + $0x8] sm:$0xff pattern:$0x73625140]
    %v92 = vld.sshfl [vmem:[#allocation1 + $0x10] sm:$0xff pattern:$0x73625140]
    %v93 = vld.sshfl [vmem:[#allocation1 + $0x18] sm:$0xff pattern:$0x73625140]
    %v98 = vsel %vm80, %v90, 0.0
    %v99 = vsel %vm80, %v91, 0.0
    %v100 = vadd.f32 %v98, %v99
    %v101 = vsel %vm80, %v92, 0.0
    %v102 = vadd.f32 %v100, %v101
    %v103 = vsel %vm80, %v93, 0.0
    %v104 = vadd.f32 %v102, %v103
    %105 = vadd.xlane.f32.xlu0 %v104
    %v106 = vpop.xlane.xlu0 %105
    %s107 = sld [smem:[#allocation5 + $0x1]]
    %v108 = vstv %s107
    %v109 = vadd.f32 %v106, %v108
    %v110 = vxor.u32 %v109, 2147483648
    %v111 = vmul.f32 %v110, 1.442695
    %v112 = vpow.pop %v111
    %v113 = vadd.f32 %v112, 1.0
    %v114 = vrcp.pop %v113
    %v115 = vmul.f32 %v113, %v114
    %v116 = vsub.f32 1.0, %v115
    %v117 = vmul.f32 %v114, %v116
    %v118 = vadd.f32 %v114, %v117
    %vm119 = vweird.f32 %v113
    %vm120 = vweird.f32 %v114
    %vm121 = vmor %vm119, %vm120
    %v122 = vsel %vm121, %v114, %v118
    %v123 = vand.u32 2147483647, %v113
    %vm124 = vcmp.eq.f32.partialorder %v123, 8.507059e+37
    %v125 = vand.u32 %v113, 2147483648
    %v126 = vor.u32 1.1754944e-38, %v125
    %v127 = vsel %vm124, %v126, %v122
    %v128 = vmul.f32 1.0, %v127
    %vm129 = vcmask 1024
    %130 = vst.msk [vmem:[%s12] sm:$0x3] %vm129, %v128
    %132 = vst [vmem:[#allocation1] ss:$4 sm:$0xff] %v70
    %v133 = vld.sshfl [vmem:[#allocation1] sm:$0xff pattern:$0x73625140]
    %v134 = vld.sshfl [vmem:[#allocation1 + $0x8] sm:$0xff pattern:$0x73625140]
    %v135 = vld.sshfl [vmem:[#allocation1 + $0x10] sm:$0xff pattern:$0x73625140]
    %v136 = vld.sshfl [vmem:[#allocation1 + $0x18] sm:$0xff pattern:$0x73625140]
    %v141 = vpack.c.bf16 %v133, %v133
    %v142 = vpack.c.bf16 %v134, %v134
    %v143 = vpack.c.bf16 %v135, %v135
    %v144 = vpack.c.bf16 %v136, %v136
    %v145 = vld [vmem:[#allocation2] sm:$0xff]
    %v146 = vld [vmem:[#allocation2 + $0x8] sm:$0xff]
    %v147 = vld [vmem:[#allocation2 + $0x10] sm:$0xff]
    %v148 = vld [vmem:[#allocation2 + $0x18] sm:$0xff]
    %v149 = vld [vmem:[#allocation2 + $0x20] sm:$0xff]
    %v150 = vld [vmem:[#allocation2 + $0x28] sm:$0xff]
    %v151 = vld [vmem:[#allocation2 + $0x30] sm:$0xff]
    %v152 = vld [vmem:[#allocation2 + $0x38] sm:$0xff]
    %v153 = vld [vmem:[#allocation2 + $0x40] sm:$0xff]
    %v154 = vld [vmem:[#allocation2 + $0x48] sm:$0xff]
    %v155 = vld [vmem:[#allocation2 + $0x50] sm:$0xff]
    %v156 = vld [vmem:[#allocation2 + $0x58] sm:$0xff]
    %v157 = vld [vmem:[#allocation2 + $0x60] sm:$0xff]
    %v158 = vld [vmem:[#allocation2 + $0x68] sm:$0xff]
    %v159 = vld [vmem:[#allocation2 + $0x70] sm:$0xff]
    %v160 = vld [vmem:[#allocation2 + $0x78] sm:$0xff]
    %v161 = vld [vmem:[#allocation2 + $0x80] sm:$0xff]
    %v162 = vld [vmem:[#allocation2 + $0x88] sm:$0xff]
    %v163 = vld [vmem:[#allocation2 + $0x90] sm:$0xff]
    %v164 = vld [vmem:[#allocation2 + $0x98] sm:$0xff]
    %v165 = vld [vmem:[#allocation2 + $0xa0] sm:$0xff]
    %v166 = vld [vmem:[#allocation2 + $0xa8] sm:$0xff]
    %v167 = vld [vmem:[#allocation2 + $0xb0] sm:$0xff]
    %v168 = vld [vmem:[#allocation2 + $0xb8] sm:$0xff]
    %v169 = vld [vmem:[#allocation2 + $0xc0] sm:$0xff]
    %v170 = vld [vmem:[#allocation2 + $0xc8] sm:$0xff]
    %v171 = vld [vmem:[#allocation2 + $0xd0] sm:$0xff]
    %v172 = vld [vmem:[#allocation2 + $0xd8] sm:$0xff]
    %v173 = vld [vmem:[#allocation2 + $0xe0] sm:$0xff]
    %v174 = vld [vmem:[#allocation2 + $0xe8] sm:$0xff]
    %v175 = vld [vmem:[#allocation2 + $0xf0] sm:$0xff]
    %v176 = vld [vmem:[#allocation2 + $0xf8] sm:$0xff]
    %v177 = vld [vmem:[#allocation2 + $0x100] sm:$0xff]
    %v178 = vld [vmem:[#allocation2 + $0x108] sm:$0xff]
    %v179 = vld [vmem:[#allocation2 + $0x110] sm:$0xff]
    %v180 = vld [vmem:[#allocation2 + $0x118] sm:$0xff]
    %v181 = vld [vmem:[#allocation2 + $0x120] sm:$0xff]
    %v182 = vld [vmem:[#allocation2 + $0x128] sm:$0xff]
    %v183 = vld [vmem:[#allocation2 + $0x130] sm:$0xff]
    %v184 = vld [vmem:[#allocation2 + $0x138] sm:$0xff]
    %v185 = vld [vmem:[#allocation2 + $0x140] sm:$0xff]
    %v186 = vld [vmem:[#allocation2 + $0x148] sm:$0xff]
    %v187 = vld [vmem:[#allocation2 + $0x150] sm:$0xff]
    %v188 = vld [vmem:[#allocation2 + $0x158] sm:$0xff]
    %v189 = vld [vmem:[#allocation2 + $0x160] sm:$0xff]
    %v190 = vld [vmem:[#allocation2 + $0x168] sm:$0xff]
    %v191 = vld [vmem:[#allocation2 + $0x170] sm:$0xff]
    %v192 = vld [vmem:[#allocation2 + $0x178] sm:$0xff]
    %v193 = vld [vmem:[#allocation2 + $0x180] sm:$0xff]
    %v194 = vld [vmem:[#allocation2 + $0x188] sm:$0xff]
    %v195 = vld [vmem:[#allocation2 + $0x190] sm:$0xff]
    %v196 = vld [vmem:[#allocation2 + $0x198] sm:$0xff]
    %v197 = vld [vmem:[#allocation2 + $0x1a0] sm:$0xff]
    %v198 = vld [vmem:[#allocation2 + $0x1a8] sm:$0xff]
    %v199 = vld [vmem:[#allocation2 + $0x1b0] sm:$0xff]
    %v200 = vld [vmem:[#allocation2 + $0x1b8] sm:$0xff]
    %v201 = vld [vmem:[#allocation2 + $0x1c0] sm:$0xff]
    %v202 = vld [vmem:[#allocation2 + $0x1c8] sm:$0xff]
    %v203 = vld [vmem:[#allocation2 + $0x1d0] sm:$0xff]
    %v204 = vld [vmem:[#allocation2 + $0x1d8] sm:$0xff]
    %v205 = vld [vmem:[#allocation2 + $0x1e0] sm:$0xff]
    %v206 = vld [vmem:[#allocation2 + $0x1e8] sm:$0xff]
    %v207 = vld [vmem:[#allocation2 + $0x1f0] sm:$0xff]
    %v208 = vld [vmem:[#allocation2 + $0x1f8] sm:$0xff]
    %v209 = vld [vmem:[#allocation2 + $0x200] sm:$0xff]
    %v210 = vld [vmem:[#allocation2 + $0x208] sm:$0xff]
    %v211 = vld [vmem:[#allocation2 + $0x210] sm:$0xff]
    %v212 = vld [vmem:[#allocation2 + $0x218] sm:$0xff]
    %v213 = vld [vmem:[#allocation2 + $0x220] sm:$0xff]
    %v214 = vld [vmem:[#allocation2 + $0x228] sm:$0xff]
    %v215 = vld [vmem:[#allocation2 + $0x230] sm:$0xff]
    %v216 = vld [vmem:[#allocation2 + $0x238] sm:$0xff]
    %v217 = vld [vmem:[#allocation2 + $0x240] sm:$0xff]
    %v218 = vld [vmem:[#allocation2 + $0x248] sm:$0xff]
    %v219 = vld [vmem:[#allocation2 + $0x250] sm:$0xff]
    %v220 = vld [vmem:[#allocation2 + $0x258] sm:$0xff]
    %v221 = vld [vmem:[#allocation2 + $0x260] sm:$0xff]
    %v222 = vld [vmem:[#allocation2 + $0x268] sm:$0xff]
    %v223 = vld [vmem:[#allocation2 + $0x270] sm:$0xff]
    %v224 = vld [vmem:[#allocation2 + $0x278] sm:$0xff]
    %v225 = vld [vmem:[#allocation2 + $0x280] sm:$0xff]
    %v226 = vld [vmem:[#allocation2 + $0x288] sm:$0xff]
    %v227 = vld [vmem:[#allocation2 + $0x290] sm:$0xff]
    %v228 = vld [vmem:[#allocation2 + $0x298] sm:$0xff]
    %v229 = vld [vmem:[#allocation2 + $0x2a0] sm:$0xff]
    %v230 = vld [vmem:[#allocation2 + $0x2a8] sm:$0xff]
    %v231 = vld [vmem:[#allocation2 + $0x2b0] sm:$0xff]
    %v232 = vld [vmem:[#allocation2 + $0x2b8] sm:$0xff]
    %v233 = vld [vmem:[#allocation2 + $0x2c0] sm:$0xff]
    %v234 = vld [vmem:[#allocation2 + $0x2c8] sm:$0xff]
    %v235 = vld [vmem:[#allocation2 + $0x2d0] sm:$0xff]
    %v236 = vld [vmem:[#allocation2 + $0x2d8] sm:$0xff]
    %v237 = vld [vmem:[#allocation2 + $0x2e0] sm:$0xff]
    %v238 = vld [vmem:[#allocation2 + $0x2e8] sm:$0xff]
    %v239 = vld [vmem:[#allocation2 + $0x2f0] sm:$0xff]
    %v240 = vld [vmem:[#allocation2 + $0x2f8] sm:$0xff]
    %v241 = vld [vmem:[#allocation2 + $0x300] sm:$0xff]
    %v242 = vld [vmem:[#allocation2 + $0x308] sm:$0xff]
    %v243 = vld [vmem:[#allocation2 + $0x310] sm:$0xff]
    %v244 = vld [vmem:[#allocation2 + $0x318] sm:$0xff]
    %v245 = vld [vmem:[#allocation2 + $0x320] sm:$0xff]
    %v246 = vld [vmem:[#allocation2 + $0x328] sm:$0xff]
    %v247 = vld [vmem:[#allocation2 + $0x330] sm:$0xff]
    %v248 = vld [vmem:[#allocation2 + $0x338] sm:$0xff]
    %v249 = vld [vmem:[#allocation2 + $0x340] sm:$0xff]
    %v250 = vld [vmem:[#allocation2 + $0x348] sm:$0xff]
    %v251 = vld [vmem:[#allocation2 + $0x350] sm:$0xff]
    %v252 = vld [vmem:[#allocation2 + $0x358] sm:$0xff]
    %v253 = vld [vmem:[#allocation2 + $0x360] sm:$0xff]
    %v254 = vld [vmem:[#allocation2 + $0x368] sm:$0xff]
    %v255 = vld [vmem:[#allocation2 + $0x370] sm:$0xff]
    %v256 = vld [vmem:[#allocation2 + $0x378] sm:$0xff]
    %v257 = vld [vmem:[#allocation2 + $0x380] sm:$0xff]
    %v258 = vld [vmem:[#allocation2 + $0x388] sm:$0xff]
    %v259 = vld [vmem:[#allocation2 + $0x390] sm:$0xff]
    %v260 = vld [vmem:[#allocation2 + $0x398] sm:$0xff]
    %v261 = vld [vmem:[#allocation2 + $0x3a0] sm:$0xff]
    %v262 = vld [vmem:[#allocation2 + $0x3a8] sm:$0xff]
    %v263 = vld [vmem:[#allocation2 + $0x3b0] sm:$0xff]
    %v264 = vld [vmem:[#allocation2 + $0x3b8] sm:$0xff]
    %v265 = vld [vmem:[#allocation2 + $0x3c0] sm:$0xff]
    %v266 = vld [vmem:[#allocation2 + $0x3c8] sm:$0xff]
    %v267 = vld [vmem:[#allocation2 + $0x3d0] sm:$0xff]
    %v268 = vld [vmem:[#allocation2 + $0x3d8] sm:$0xff]
    %v269 = vld [vmem:[#allocation2 + $0x3e0] sm:$0xff]
    %v270 = vld [vmem:[#allocation2 + $0x3e8] sm:$0xff]
    %v271 = vld [vmem:[#allocation2 + $0x3f0] sm:$0xff]
    %v272 = vld [vmem:[#allocation2 + $0x3f8] sm:$0xff]
    %v273 = vld [vmem:[%s1] sm:$0x3]
    %v274 = vpack.c.bf16 %v273, %v273
    %v275 = vld [vmem:[%s3] sm:$0xff]
    %v276 = vld [vmem:[%s3 + $0x8] sm:$0xff]
    %v279 = vunpack.c.l.b16 %v275
    %v280 = vunpack.c.h.b16 %v275
    %v281 = vunpack.c.l.b16 %v276
    %v282 = vunpack.c.h.b16 %v276
    %v283 = vpack.c.b16 %v279, %v279
    %v284 = vpack.c.b16 %v280, %v280
    %v285 = vpack.c.b16 %v281, %v281
    %v286 = vpack.c.b16 %v282, %v282
    %vm287 = vcmask 64512
    %v289 = vsel %vm287, %v274, 0
    %v292 = vsel %vm84, %v283, 0
    %v295 = vsel %vm84, %v284, 0
    %v298 = vsel %vm84, %v285, 0
    %v301 = vsel %vm84, %v286, 0
    %303 = vmatpush.bf16.msra.mxu0 0
    %304 = vmatpush.bf16.msra.mxu0 0
    %305 = vmatpush.bf16.msra.mxu0 0
    %306 = vmatpush.bf16.msra.mxu0 0
    %307 = vmatpush.bf16.msra.mxu0 0
    %308 = vmatpush.bf16.msra.mxu0 0
    %309 = vmatpush.bf16.msra.mxu0 0
    %310 = vmatpush.bf16.msra.mxu0 %v292
    %311 = vmatmul.bf16.gmra.mxu0 %v289
    %v312 = vpop.f32.mrf.mxu0
    %v313 = vadd.f32 0.0, %v312
    %v314 = vpop.f32.mrf.mxu0
    %315 = vdwg.mxu0
    %316 = vmatpush.bf16.msra.mxu0 0
    %317 = vmatpush.bf16.msra.mxu0 0
    %318 = vmatpush.bf16.msra.mxu0 0
    %319 = vmatpush.bf16.msra.mxu0 0
    %320 = vmatpush.bf16.msra.mxu0 0
    %321 = vmatpush.bf16.msra.mxu0 0
    %322 = vmatpush.bf16.msra.mxu0 0
    %323 = vmatpush.bf16.msra.mxu0 %v295
    %324 = vmatmul.bf16.gmra.mxu0 %v289
    %v325 = vpop.f32.mrf.mxu0
    %v326 = vadd.f32 0.0, %v325
    %v327 = vpop.f32.mrf.mxu0
    %328 = vdwg.mxu0
    %329 = vmatpush.bf16.msra.mxu0 0
    %330 = vmatpush.bf16.msra.mxu0 0
    %331 = vmatpush.bf16.msra.mxu0 0
    %332 = vmatpush.bf16.msra.mxu0 0
    %333 = vmatpush.bf16.msra.mxu0 0
    %334 = vmatpush.bf16.msra.mxu0 0
    %335 = vmatpush.bf16.msra.mxu0 0
    %336 = vmatpush.bf16.msra.mxu0 %v298
    %337 = vmatmul.bf16.gmra.mxu0 %v289
    %v338 = vpop.f32.mrf.mxu0
    %v339 = vadd.f32 0.0, %v338
    %v340 = vpop.f32.mrf.mxu0
    %341 = vdwg.mxu0
    %342 = vmatpush.bf16.msra.mxu0 0
    %343 = vmatpush.bf16.msra.mxu0 0
    %344 = vmatpush.bf16.msra.mxu0 0
    %345 = vmatpush.bf16.msra.mxu0 0
    %346 = vmatpush.bf16.msra.mxu0 0
    %347 = vmatpush.bf16.msra.mxu0 0
    %348 = vmatpush.bf16.msra.mxu0 0
    %349 = vmatpush.bf16.msra.mxu0 %v301
    %350 = vmatmul.bf16.gmra.mxu0 %v289
    %v351 = vpop.f32.mrf.mxu0
    %v352 = vadd.f32 0.0, %v351
    %v353 = vpop.f32.mrf.mxu0
    %354 = vdwg.mxu0
    %v483 = vunpack.c.l.b16 %v145
    %v484 = vunpack.c.h.b16 %v145
    %v485 = vunpack.c.l.b16 %v146
    %v486 = vunpack.c.h.b16 %v146
    %v487 = vunpack.c.l.b16 %v147
    %v488 = vunpack.c.h.b16 %v147
    %v489 = vunpack.c.l.b16 %v148
    %v490 = vunpack.c.h.b16 %v148
    %v491 = vunpack.c.l.b16 %v149
    %v492 = vunpack.c.h.b16 %v149
    %v493 = vunpack.c.l.b16 %v150
    %v494 = vunpack.c.h.b16 %v150
    %v495 = vunpack.c.l.b16 %v151
    %v496 = vunpack.c.h.b16 %v151
    %v497 = vunpack.c.l.b16 %v152
    %v498 = vunpack.c.h.b16 %v152
    %v499 = vunpack.c.l.b16 %v153
    %v500 = vunpack.c.h.b16 %v153
    %v501 = vunpack.c.l.b16 %v154
    %v502 = vunpack.c.h.b16 %v154
    %v503 = vunpack.c.l.b16 %v155
    %v504 = vunpack.c.h.b16 %v155
    %v505 = vunpack.c.l.b16 %v156
    %v506 = vunpack.c.h.b16 %v156
    %v507 = vunpack.c.l.b16 %v157
    %v508 = vunpack.c.h.b16 %v157
    %v509 = vunpack.c.l.b16 %v158
    %v510 = vunpack.c.h.b16 %v158
    %v511 = vunpack.c.l.b16 %v159
    %v512 = vunpack.c.h.b16 %v159
    %v513 = vunpack.c.l.b16 %v160
    %v514 = vunpack.c.h.b16 %v160
    %v515 = vunpack.c.l.b16 %v161
    %v516 = vunpack.c.h.b16 %v161
    %v517 = vunpack.c.l.b16 %v162
    %v518 = vunpack.c.h.b16 %v162
    %v519 = vunpack.c.l.b16 %v163
    %v520 = vunpack.c.h.b16 %v163
    %v521 = vunpack.c.l.b16 %v164
    %v522 = vunpack.c.h.b16 %v164
    %v523 = vunpack.c.l.b16 %v165
    %v524 = vunpack.c.h.b16 %v165
    %v525 = vunpack.c.l.b16 %v166
    %v526 = vunpack.c.h.b16 %v166
    %v527 = vunpack.c.l.b16 %v167
    %v528 = vunpack.c.h.b16 %v167
    %v529 = vunpack.c.l.b16 %v168
    %v530 = vunpack.c.h.b16 %v168
    %v531 = vunpack.c.l.b16 %v169
    %v532 = vunpack.c.h.b16 %v169
    %v533 = vunpack.c.l.b16 %v170
    %v534 = vunpack.c.h.b16 %v170
    %v535 = vunpack.c.l.b16 %v171
    %v536 = vunpack.c.h.b16 %v171
    %v537 = vunpack.c.l.b16 %v172
    %v538 = vunpack.c.h.b16 %v172
    %v539 = vunpack.c.l.b16 %v173
    %v540 = vunpack.c.h.b16 %v173
    %v541 = vunpack.c.l.b16 %v174
    %v542 = vunpack.c.h.b16 %v174
    %v543 = vunpack.c.l.b16 %v175
    %v544 = vunpack.c.h.b16 %v175
    %v545 = vunpack.c.l.b16 %v176
    %v546 = vunpack.c.h.b16 %v176
    %v547 = vunpack.c.l.b16 %v177
    %v548 = vunpack.c.h.b16 %v177
    %v549 = vunpack.c.l.b16 %v178
    %v550 = vunpack.c.h.b16 %v178
    %v551 = vunpack.c.l.b16 %v179
    %v552 = vunpack.c.h.b16 %v179
    %v553 = vunpack.c.l.b16 %v180
    %v554 = vunpack.c.h.b16 %v180
    %v555 = vunpack.c.l.b16 %v181
    %v556 = vunpack.c.h.b16 %v181
    %v557 = vunpack.c.l.b16 %v182
    %v558 = vunpack.c.h.b16 %v182
    %v559 = vunpack.c.l.b16 %v183
    %v560 = vunpack.c.h.b16 %v183
    %v561 = vunpack.c.l.b16 %v184
    %v562 = vunpack.c.h.b16 %v184
    %v563 = vunpack.c.l.b16 %v185
    %v564 = vunpack.c.h.b16 %v185
    %v565 = vunpack.c.l.b16 %v186
    %v566 = vunpack.c.h.b16 %v186
    %v567 = vunpack.c.l.b16 %v187
    %v568 = vunpack.c.h.b16 %v187
    %v569 = vunpack.c.l.b16 %v188
    %v570 = vunpack.c.h.b16 %v188
    %v571 = vunpack.c.l.b16 %v189
    %v572 = vunpack.c.h.b16 %v189
    %v573 = vunpack.c.l.b16 %v190
    %v574 = vunpack.c.h.b16 %v190
    %v575 = vunpack.c.l.b16 %v191
    %v576 = vunpack.c.h.b16 %v191
    %v577 = vunpack.c.l.b16 %v192
    %v578 = vunpack.c.h.b16 %v192
    %v579 = vunpack.c.l.b16 %v193
    %v580 = vunpack.c.h.b16 %v193
    %v581 = vunpack.c.l.b16 %v194
    %v582 = vunpack.c.h.b16 %v194
    %v583 = vunpack.c.l.b16 %v195
    %v584 = vunpack.c.h.b16 %v195
    %v585 = vunpack.c.l.b16 %v196
    %v586 = vunpack.c.h.b16 %v196
    %v587 = vunpack.c.l.b16 %v197
    %v588 = vunpack.c.h.b16 %v197
    %v589 = vunpack.c.l.b16 %v198
    %v590 = vunpack.c.h.b16 %v198
    %v591 = vunpack.c.l.b16 %v199
    %v592 = vunpack.c.h.b16 %v199
    %v593 = vunpack.c.l.b16 %v200
    %v594 = vunpack.c.h.b16 %v200
    %v595 = vunpack.c.l.b16 %v201
    %v596 = vunpack.c.h.b16 %v201
    %v597 = vunpack.c.l.b16 %v202
    %v598 = vunpack.c.h.b16 %v202
    %v599 = vunpack.c.l.b16 %v203
    %v600 = vunpack.c.h.b16 %v203
    %v601 = vunpack.c.l.b16 %v204
    %v602 = vunpack.c.h.b16 %v204
    %v603 = vunpack.c.l.b16 %v205
    %v604 = vunpack.c.h.b16 %v205
    %v605 = vunpack.c.l.b16 %v206
    %v606 = vunpack.c.h.b16 %v206
    %v607 = vunpack.c.l.b16 %v207
    %v608 = vunpack.c.h.b16 %v207
    %v609 = vunpack.c.l.b16 %v208
    %v610 = vunpack.c.h.b16 %v208
    %v611 = vunpack.c.l.b16 %v209
    %v612 = vunpack.c.h.b16 %v209
    %v613 = vunpack.c.l.b16 %v210
    %v614 = vunpack.c.h.b16 %v210
    %v615 = vunpack.c.l.b16 %v211
    %v616 = vunpack.c.h.b16 %v211
    %v617 = vunpack.c.l.b16 %v212
    %v618 = vunpack.c.h.b16 %v212
    %v619 = vunpack.c.l.b16 %v213
    %v620 = vunpack.c.h.b16 %v213
    %v621 = vunpack.c.l.b16 %v214
    %v622 = vunpack.c.h.b16 %v214
    %v623 = vunpack.c.l.b16 %v215
    %v624 = vunpack.c.h.b16 %v215
    %v625 = vunpack.c.l.b16 %v216
    %v626 = vunpack.c.h.b16 %v216
    %v627 = vunpack.c.l.b16 %v217
    %v628 = vunpack.c.h.b16 %v217
    %v629 = vunpack.c.l.b16 %v218
    %v630 = vunpack.c.h.b16 %v218
    %v631 = vunpack.c.l.b16 %v219
    %v632 = vunpack.c.h.b16 %v219
    %v633 = vunpack.c.l.b16 %v220
    %v634 = vunpack.c.h.b16 %v220
    %v635 = vunpack.c.l.b16 %v221
    %v636 = vunpack.c.h.b16 %v221
    %v637 = vunpack.c.l.b16 %v222
    %v638 = vunpack.c.h.b16 %v222
    %v639 = vunpack.c.l.b16 %v223
    %v640 = vunpack.c.h.b16 %v223
    %v641 = vunpack.c.l.b16 %v224
    %v642 = vunpack.c.h.b16 %v224
    %v643 = vunpack.c.l.b16 %v225
    %v644 = vunpack.c.h.b16 %v225
    %v645 = vunpack.c.l.b16 %v226
    %v646 = vunpack.c.h.b16 %v226
    %v647 = vunpack.c.l.b16 %v227
    %v648 = vunpack.c.h.b16 %v227
    %v649 = vunpack.c.l.b16 %v228
    %v650 = vunpack.c.h.b16 %v228
    %v651 = vunpack.c.l.b16 %v229
    %v652 = vunpack.c.h.b16 %v229
    %v653 = vunpack.c.l.b16 %v230
    %v654 = vunpack.c.h.b16 %v230
    %v655 = vunpack.c.l.b16 %v231
    %v656 = vunpack.c.h.b16 %v231
    %v657 = vunpack.c.l.b16 %v232
    %v658 = vunpack.c.h.b16 %v232
    %v659 = vunpack.c.l.b16 %v233
    %v660 = vunpack.c.h.b16 %v233
    %v661 = vunpack.c.l.b16 %v234
    %v662 = vunpack.c.h.b16 %v234
    %v663 = vunpack.c.l.b16 %v235
    %v664 = vunpack.c.h.b16 %v235
    %v665 = vunpack.c.l.b16 %v236
    %v666 = vunpack.c.h.b16 %v236
    %v667 = vunpack.c.l.b16 %v237
    %v668 = vunpack.c.h.b16 %v237
    %v669 = vunpack.c.l.b16 %v238
    %v670 = vunpack.c.h.b16 %v238
    %v671 = vunpack.c.l.b16 %v239
    %v672 = vunpack.c.h.b16 %v239
    %v673 = vunpack.c.l.b16 %v240
    %v674 = vunpack.c.h.b16 %v240
    %v675 = vunpack.c.l.b16 %v241
    %v676 = vunpack.c.h.b16 %v241
    %v677 = vunpack.c.l.b16 %v242
    %v678 = vunpack.c.h.b16 %v242
    %v679 = vunpack.c.l.b16 %v243
    %v680 = vunpack.c.h.b16 %v243
    %v681 = vunpack.c.l.b16 %v244
    %v682 = vunpack.c.h.b16 %v244
    %v683 = vunpack.c.l.b16 %v245
    %v684 = vunpack.c.h.b16 %v245
    %v685 = vunpack.c.l.b16 %v246
    %v686 = vunpack.c.h.b16 %v246
    %v687 = vunpack.c.l.b16 %v247
    %v688 = vunpack.c.h.b16 %v247
    %v689 = vunpack.c.l.b16 %v248
    %v690 = vunpack.c.h.b16 %v248
    %v691 = vunpack.c.l.b16 %v249
    %v692 = vunpack.c.h.b16 %v249
    %v693 = vunpack.c.l.b16 %v250
    %v694 = vunpack.c.h.b16 %v250
    %v695 = vunpack.c.l.b16 %v251
    %v696 = vunpack.c.h.b16 %v251
    %v697 = vunpack.c.l.b16 %v252
    %v698 = vunpack.c.h.b16 %v252
    %v699 = vunpack.c.l.b16 %v253
    %v700 = vunpack.c.h.b16 %v253
    %v701 = vunpack.c.l.b16 %v254
    %v702 = vunpack.c.h.b16 %v254
    %v703 = vunpack.c.l.b16 %v255
    %v704 = vunpack.c.h.b16 %v255
    %v705 = vunpack.c.l.b16 %v256
    %v706 = vunpack.c.h.b16 %v256
    %v707 = vunpack.c.l.b16 %v257
    %v708 = vunpack.c.h.b16 %v257
    %v709 = vunpack.c.l.b16 %v258
    %v710 = vunpack.c.h.b16 %v258
    %v711 = vunpack.c.l.b16 %v259
    %v712 = vunpack.c.h.b16 %v259
    %v713 = vunpack.c.l.b16 %v260
    %v714 = vunpack.c.h.b16 %v260
    %v715 = vunpack.c.l.b16 %v261
    %v716 = vunpack.c.h.b16 %v261
    %v717 = vunpack.c.l.b16 %v262
    %v718 = vunpack.c.h.b16 %v262
    %v719 = vunpack.c.l.b16 %v263
    %v720 = vunpack.c.h.b16 %v263
    %v721 = vunpack.c.l.b16 %v264
    %v722 = vunpack.c.h.b16 %v264
    %v723 = vunpack.c.l.b16 %v265
    %v724 = vunpack.c.h.b16 %v265
    %v725 = vunpack.c.l.b16 %v266
    %v726 = vunpack.c.h.b16 %v266
    %v727 = vunpack.c.l.b16 %v267
    %v728 = vunpack.c.h.b16 %v267
    %v729 = vunpack.c.l.b16 %v268
    %v730 = vunpack.c.h.b16 %v268
    %v731 = vunpack.c.l.b16 %v269
    %v732 = vunpack.c.h.b16 %v269
    %v733 = vunpack.c.l.b16 %v270
    %v734 = vunpack.c.h.b16 %v270
    %v735 = vunpack.c.l.b16 %v271
    %v736 = vunpack.c.h.b16 %v271
    %v737 = vunpack.c.l.b16 %v272
    %v738 = vunpack.c.h.b16 %v272
    %v739 = vpack.c.b16 %v487, %v483
    %v740 = vpack.c.b16 %v488, %v484
    %v741 = vpack.c.b16 %v489, %v485
    %v742 = vpack.c.b16 %v490, %v486
    %v743 = vpack.c.b16 %v495, %v491
    %v744 = vpack.c.b16 %v496, %v492
    %v745 = vpack.c.b16 %v497, %v493
    %v746 = vpack.c.b16 %v498, %v494
    %v747 = vpack.c.b16 %v503, %v499
    %v748 = vpack.c.b16 %v504, %v500
    %v749 = vpack.c.b16 %v505, %v501
    %v750 = vpack.c.b16 %v506, %v502
    %v751 = vpack.c.b16 %v511, %v507
    %v752 = vpack.c.b16 %v512, %v508
    %v753 = vpack.c.b16 %v513, %v509
    %v754 = vpack.c.b16 %v514, %v510
    %v755 = vpack.c.b16 %v519, %v515
    %v756 = vpack.c.b16 %v520, %v516
    %v757 = vpack.c.b16 %v521, %v517
    %v758 = vpack.c.b16 %v522, %v518
    %v759 = vpack.c.b16 %v527, %v523
    %v760 = vpack.c.b16 %v528, %v524
    %v761 = vpack.c.b16 %v529, %v525
    %v762 = vpack.c.b16 %v530, %v526
    %v763 = vpack.c.b16 %v535, %v531
    %v764 = vpack.c.b16 %v536, %v532
    %v765 = vpack.c.b16 %v537, %v533
    %v766 = vpack.c.b16 %v538, %v534
    %v767 = vpack.c.b16 %v543, %v539
    %v768 = vpack.c.b16 %v544, %v540
    %v769 = vpack.c.b16 %v545, %v541
    %v770 = vpack.c.b16 %v546, %v542
    %v771 = vpack.c.b16 %v551, %v547
    %v772 = vpack.c.b16 %v552, %v548
    %v773 = vpack.c.b16 %v553, %v549
    %v774 = vpack.c.b16 %v554, %v550
    %v775 = vpack.c.b16 %v559, %v555
    %v776 = vpack.c.b16 %v560, %v556
    %v777 = vpack.c.b16 %v561, %v557
    %v778 = vpack.c.b16 %v562, %v558
    %v779 = vpack.c.b16 %v567, %v563
    %v780 = vpack.c.b16 %v568, %v564
    %v781 = vpack.c.b16 %v569, %v565
    %v782 = vpack.c.b16 %v570, %v566
    %v783 = vpack.c.b16 %v575, %v571
    %v784 = vpack.c.b16 %v576, %v572
    %v785 = vpack.c.b16 %v577, %v573
    %v786 = vpack.c.b16 %v578, %v574
    %v787 = vpack.c.b16 %v583, %v579
    %v788 = vpack.c.b16 %v584, %v580
    %v789 = vpack.c.b16 %v585, %v581
    %v790 = vpack.c.b16 %v586, %v582
    %v791 = vpack.c.b16 %v591, %v587
    %v792 = vpack.c.b16 %v592, %v588
    %v793 = vpack.c.b16 %v593, %v589
    %v794 = vpack.c.b16 %v594, %v590
    %v795 = vpack.c.b16 %v599, %v595
    %v796 = vpack.c.b16 %v600, %v596
    %v797 = vpack.c.b16 %v601, %v597
    %v798 = vpack.c.b16 %v602, %v598
    %v799 = vpack.c.b16 %v607, %v603
    %v800 = vpack.c.b16 %v608, %v604
    %v801 = vpack.c.b16 %v609, %v605
    %v802 = vpack.c.b16 %v610, %v606
    %v803 = vpack.c.b16 %v615, %v611
    %v804 = vpack.c.b16 %v616, %v612
    %v805 = vpack.c.b16 %v617, %v613
    %v806 = vpack.c.b16 %v618, %v614
    %v807 = vpack.c.b16 %v623, %v619
    %v808 = vpack.c.b16 %v624, %v620
    %v809 = vpack.c.b16 %v625, %v621
    %v810 = vpack.c.b16 %v626, %v622
    %v811 = vpack.c.b16 %v631, %v627
    %v812 = vpack.c.b16 %v632, %v628
    %v813 = vpack.c.b16 %v633, %v629
    %v814 = vpack.c.b16 %v634, %v630
    %v815 = vpack.c.b16 %v639, %v635
    %v816 = vpack.c.b16 %v640, %v636
    %v817 = vpack.c.b16 %v641, %v637
    %v818 = vpack.c.b16 %v642, %v638
    %v819 = vpack.c.b16 %v647, %v643
    %v820 = vpack.c.b16 %v648, %v644
    %v821 = vpack.c.b16 %v649, %v645
    %v822 = vpack.c.b16 %v650, %v646
    %v823 = vpack.c.b16 %v655, %v651
    %v824 = vpack.c.b16 %v656, %v652
    %v825 = vpack.c.b16 %v657, %v653
    %v826 = vpack.c.b16 %v658, %v654
    %v827 = vpack.c.b16 %v663, %v659
    %v828 = vpack.c.b16 %v664, %v660
    %v829 = vpack.c.b16 %v665, %v661
    %v830 = vpack.c.b16 %v666, %v662
    %v831 = vpack.c.b16 %v671, %v667
    %v832 = vpack.c.b16 %v672, %v668
    %v833 = vpack.c.b16 %v673, %v669
    %v834 = vpack.c.b16 %v674, %v670
    %v835 = vpack.c.b16 %v679, %v675
    %v836 = vpack.c.b16 %v680, %v676
    %v837 = vpack.c.b16 %v681, %v677
    %v838 = vpack.c.b16 %v682, %v678
    %v839 = vpack.c.b16 %v687, %v683
    %v840 = vpack.c.b16 %v688, %v684
    %v841 = vpack.c.b16 %v689, %v685
    %v842 = vpack.c.b16 %v690, %v686
    %v843 = vpack.c.b16 %v695, %v691
    %v844 = vpack.c.b16 %v696, %v692
    %v845 = vpack.c.b16 %v697, %v693
    %v846 = vpack.c.b16 %v698, %v694
    %v847 = vpack.c.b16 %v703, %v699
    %v848 = vpack.c.b16 %v704, %v700
    %v849 = vpack.c.b16 %v705, %v701
    %v850 = vpack.c.b16 %v706, %v702
    %v851 = vpack.c.b16 %v711, %v707
    %v852 = vpack.c.b16 %v712, %v708
    %v853 = vpack.c.b16 %v713, %v709
    %v854 = vpack.c.b16 %v714, %v710
    %v855 = vpack.c.b16 %v719, %v715
    %v856 = vpack.c.b16 %v720, %v716
    %v857 = vpack.c.b16 %v721, %v717
    %v858 = vpack.c.b16 %v722, %v718
    %v859 = vpack.c.b16 %v727, %v723
    %v860 = vpack.c.b16 %v728, %v724
    %v861 = vpack.c.b16 %v729, %v725
    %v862 = vpack.c.b16 %v730, %v726
    %v863 = vpack.c.b16 %v735, %v731
    %v864 = vpack.c.b16 %v736, %v732
    %v865 = vpack.c.b16 %v737, %v733
    %v866 = vpack.c.b16 %v738, %v734
    %995 = vmatpush.bf16.msra.mxu0 %v767
    %996 = vmatpush.bf16.msra.mxu0 %v763
    %997 = vmatpush.bf16.msra.mxu0 %v759
    %998 = vmatpush.bf16.msra.mxu0 %v755
    %999 = vmatpush.bf16.msra.mxu0 %v751
    %1000 = vmatpush.bf16.msra.mxu0 %v747
    %1001 = vmatpush.bf16.msra.mxu0 %v743
    %1002 = vmatpush.bf16.msra.mxu0 %v739
    %1003 = vmatmul.bf16.gmra.mxu0 %v141
    %v1004 = vpop.f32.mrf.mxu0
    %v1005 = vadd.f32 %v313, %v1004
    %v1006 = vpop.f32.mrf.mxu0
    %1007 = vdwg.mxu0
    %1008 = vmatpush.bf16.msra.mxu0 %v799
    %1009 = vmatpush.bf16.msra.mxu0 %v795
    %1010 = vmatpush.bf16.msra.mxu0 %v791
    %1011 = vmatpush.bf16.msra.mxu0 %v787
    %1012 = vmatpush.bf16.msra.mxu0 %v783
    %1013 = vmatpush.bf16.msra.mxu0 %v779
    %1014 = vmatpush.bf16.msra.mxu0 %v775
    %1015 = vmatpush.bf16.msra.mxu0 %v771
    %1016 = vmatmul.bf16.gmra.mxu0 %v142
    %v1017 = vpop.f32.mrf.mxu0
    %v1018 = vadd.f32 %v1005, %v1017
    %v1019 = vpop.f32.mrf.mxu0
    %1020 = vdwg.mxu0
    %1021 = vmatpush.bf16.msra.mxu0 %v831
    %1022 = vmatpush.bf16.msra.mxu0 %v827
    %1023 = vmatpush.bf16.msra.mxu0 %v823
    %1024 = vmatpush.bf16.msra.mxu0 %v819
    %1025 = vmatpush.bf16.msra.mxu0 %v815
    %1026 = vmatpush.bf16.msra.mxu0 %v811
    %1027 = vmatpush.bf16.msra.mxu0 %v807
    %1028 = vmatpush.bf16.msra.mxu0 %v803
    %1029 = vmatmul.bf16.gmra.mxu0 %v143
    %v1030 = vpop.f32.mrf.mxu0
    %v1031 = vadd.f32 %v1018, %v1030
    %v1032 = vpop.f32.mrf.mxu0
    %1033 = vdwg.mxu0
    %1034 = vmatpush.bf16.msra.mxu0 %v863
    %1035 = vmatpush.bf16.msra.mxu0 %v859
    %1036 = vmatpush.bf16.msra.mxu0 %v855
    %1037 = vmatpush.bf16.msra.mxu0 %v851
    %1038 = vmatpush.bf16.msra.mxu0 %v847
    %1039 = vmatpush.bf16.msra.mxu0 %v843
    %1040 = vmatpush.bf16.msra.mxu0 %v839
    %1041 = vmatpush.bf16.msra.mxu0 %v835
    %1042 = vmatmul.bf16.gmra.mxu0 %v144
    %v1043 = vpop.f32.mrf.mxu0
    %v1044 = vadd.f32 %v1031, %v1043
    %v1045 = vpop.f32.mrf.mxu0
    %1046 = vdwg.mxu0
    %1047 = vmatpush.bf16.msra.mxu0 %v768
    %1048 = vmatpush.bf16.msra.mxu0 %v764
    %1049 = vmatpush.bf16.msra.mxu0 %v760
    %1050 = vmatpush.bf16.msra.mxu0 %v756
    %1051 = vmatpush.bf16.msra.mxu0 %v752
    %1052 = vmatpush.bf16.msra.mxu0 %v748
    %1053 = vmatpush.bf16.msra.mxu0 %v744
    %1054 = vmatpush.bf16.msra.mxu0 %v740
    %1055 = vmatmul.bf16.gmra.mxu0 %v141
    %v1056 = vpop.f32.mrf.mxu0
    %v1057 = vadd.f32 %v326, %v1056
    %v1058 = vpop.f32.mrf.mxu0
    %1059 = vdwg.mxu0
    %1060 = vmatpush.bf16.msra.mxu0 %v800
    %1061 = vmatpush.bf16.msra.mxu0 %v796
    %1062 = vmatpush.bf16.msra.mxu0 %v792
    %1063 = vmatpush.bf16.msra.mxu0 %v788
    %1064 = vmatpush.bf16.msra.mxu0 %v784
    %1065 = vmatpush.bf16.msra.mxu0 %v780
    %1066 = vmatpush.bf16.msra.mxu0 %v776
    %1067 = vmatpush.bf16.msra.mxu0 %v772
    %1068 = vmatmul.bf16.gmra.mxu0 %v142
    %v1069 = vpop.f32.mrf.mxu0
    %v1070 = vadd.f32 %v1057, %v1069
    %v1071 = vpop.f32.mrf.mxu0
    %1072 = vdwg.mxu0
    %1073 = vmatpush.bf16.msra.mxu0 %v832
    %1074 = vmatpush.bf16.msra.mxu0 %v828
    %1075 = vmatpush.bf16.msra.mxu0 %v824
    %1076 = vmatpush.bf16.msra.mxu0 %v820
    %1077 = vmatpush.bf16.msra.mxu0 %v816
    %1078 = vmatpush.bf16.msra.mxu0 %v812
    %1079 = vmatpush.bf16.msra.mxu0 %v808
    %1080 = vmatpush.bf16.msra.mxu0 %v804
    %1081 = vmatmul.bf16.gmra.mxu0 %v143
    %v1082 = vpop.f32.mrf.mxu0
    %v1083 = vadd.f32 %v1070, %v1082
    %v1084 = vpop.f32.mrf.mxu0
    %1085 = vdwg.mxu0
    %1086 = vmatpush.bf16.msra.mxu0 %v864
    %1087 = vmatpush.bf16.msra.mxu0 %v860
    %1088 = vmatpush.bf16.msra.mxu0 %v856
    %1089 = vmatpush.bf16.msra.mxu0 %v852
    %1090 = vmatpush.bf16.msra.mxu0 %v848
    %1091 = vmatpush.bf16.msra.mxu0 %v844
    %1092 = vmatpush.bf16.msra.mxu0 %v840
    %1093 = vmatpush.bf16.msra.mxu0 %v836
    %1094 = vmatmul.bf16.gmra.mxu0 %v144
    %v1095 = vpop.f32.mrf.mxu0
    %v1096 = vadd.f32 %v1083, %v1095
    %v1097 = vpop.f32.mrf.mxu0
    %1098 = vdwg.mxu0
    %1099 = vmatpush.bf16.msra.mxu0 %v769
    %1100 = vmatpush.bf16.msra.mxu0 %v765
    %1101 = vmatpush.bf16.msra.mxu0 %v761
    %1102 = vmatpush.bf16.msra.mxu0 %v757
    %1103 = vmatpush.bf16.msra.mxu0 %v753
    %1104 = vmatpush.bf16.msra.mxu0 %v749
    %1105 = vmatpush.bf16.msra.mxu0 %v745
    %1106 = vmatpush.bf16.msra.mxu0 %v741
    %1107 = vmatmul.bf16.gmra.mxu0 %v141
    %v1108 = vpop.f32.mrf.mxu0
    %v1109 = vadd.f32 %v339, %v1108
    %v1110 = vpop.f32.mrf.mxu0
    %1111 = vdwg.mxu0
    %1112 = vmatpush.bf16.msra.mxu0 %v801
    %1113 = vmatpush.bf16.msra.mxu0 %v797
    %1114 = vmatpush.bf16.msra.mxu0 %v793
    %1115 = vmatpush.bf16.msra.mxu0 %v789
    %1116 = vmatpush.bf16.msra.mxu0 %v785
    %1117 = vmatpush.bf16.msra.mxu0 %v781
    %1118 = vmatpush.bf16.msra.mxu0 %v777
    %1119 = vmatpush.bf16.msra.mxu0 %v773
    %1120 = vmatmul.bf16.gmra.mxu0 %v142
    %v1121 = vpop.f32.mrf.mxu0
    %v1122 = vadd.f32 %v1109, %v1121
    %v1123 = vpop.f32.mrf.mxu0
    %1124 = vdwg.mxu0
    %1125 = vmatpush.bf16.msra.mxu0 %v833
    %1126 = vmatpush.bf16.msra.mxu0 %v829
    %1127 = vmatpush.bf16.msra.mxu0 %v825
    %1128 = vmatpush.bf16.msra.mxu0 %v821
    %1129 = vmatpush.bf16.msra.mxu0 %v817
    %1130 = vmatpush.bf16.msra.mxu0 %v813
    %1131 = vmatpush.bf16.msra.mxu0 %v809
    %1132 = vmatpush.bf16.msra.mxu0 %v805
    %1133 = vmatmul.bf16.gmra.mxu0 %v143
    %v1134 = vpop.f32.mrf.mxu0
    %v1135 = vadd.f32 %v1122, %v1134
    %v1136 = vpop.f32.mrf.mxu0
    %1137 = vdwg.mxu0
    %1138 = vmatpush.bf16.msra.mxu0 %v865
    %1139 = vmatpush.bf16.msra.mxu0 %v861
    %1140 = vmatpush.bf16.msra.mxu0 %v857
    %1141 = vmatpush.bf16.msra.mxu0 %v853
    %1142 = vmatpush.bf16.msra.mxu0 %v849
    %1143 = vmatpush.bf16.msra.mxu0 %v845
    %1144 = vmatpush.bf16.msra.mxu0 %v841
    %1145 = vmatpush.bf16.msra.mxu0 %v837
    %1146 = vmatmul.bf16.gmra.mxu0 %v144
    %v1147 = vpop.f32.mrf.mxu0
    %v1148 = vadd.f32 %v1135, %v1147
    %v1149 = vpop.f32.mrf.mxu0
    %1150 = vdwg.mxu0
    %1151 = vmatpush.bf16.msra.mxu0 %v770
    %1152 = vmatpush.bf16.msra.mxu0 %v766
    %1153 = vmatpush.bf16.msra.mxu0 %v762
    %1154 = vmatpush.bf16.msra.mxu0 %v758
    %1155 = vmatpush.bf16.msra.mxu0 %v754
    %1156 = vmatpush.bf16.msra.mxu0 %v750
    %1157 = vmatpush.bf16.msra.mxu0 %v746
    %1158 = vmatpush.bf16.msra.mxu0 %v742
    %1159 = vmatmul.bf16.gmra.mxu0 %v141
    %v1160 = vpop.f32.mrf.mxu0
    %v1161 = vadd.f32 %v352, %v1160
    %v1162 = vpop.f32.mrf.mxu0
    %1163 = vdwg.mxu0
    %1164 = vmatpush.bf16.msra.mxu0 %v802
    %1165 = vmatpush.bf16.msra.mxu0 %v798
    %1166 = vmatpush.bf16.msra.mxu0 %v794
    %1167 = vmatpush.bf16.msra.mxu0 %v790
    %1168 = vmatpush.bf16.msra.mxu0 %v786
    %1169 = vmatpush.bf16.msra.mxu0 %v782
    %1170 = vmatpush.bf16.msra.mxu0 %v778
    %1171 = vmatpush.bf16.msra.mxu0 %v774
    %1172 = vmatmul.bf16.gmra.mxu0 %v142
    %v1173 = vpop.f32.mrf.mxu0
    %v1174 = vadd.f32 %v1161, %v1173
    %v1175 = vpop.f32.mrf.mxu0
    %1176 = vdwg.mxu0
    %1177 = vmatpush.bf16.msra.mxu0 %v834
    %1178 = vmatpush.bf16.msra.mxu0 %v830
    %1179 = vmatpush.bf16.msra.mxu0 %v826
    %1180 = vmatpush.bf16.msra.mxu0 %v822
    %1181 = vmatpush.bf16.msra.mxu0 %v818
    %1182 = vmatpush.bf16.msra.mxu0 %v814
    %1183 = vmatpush.bf16.msra.mxu0 %v810
    %1184 = vmatpush.bf16.msra.mxu0 %v806
    %1185 = vmatmul.bf16.gmra.mxu0 %v143
    %v1186 = vpop.f32.mrf.mxu0
    %v1187 = vadd.f32 %v1174, %v1186
    %v1188 = vpop.f32.mrf.mxu0
    %1189 = vdwg.mxu0
    %1190 = vmatpush.bf16.msra.mxu0 %v866
    %1191 = vmatpush.bf16.msra.mxu0 %v862
    %1192 = vmatpush.bf16.msra.mxu0 %v858
    %1193 = vmatpush.bf16.msra.mxu0 %v854
    %1194 = vmatpush.bf16.msra.mxu0 %v850
    %1195 = vmatpush.bf16.msra.mxu0 %v846
    %1196 = vmatpush.bf16.msra.mxu0 %v842
    %1197 = vmatpush.bf16.msra.mxu0 %v838
    %1198 = vmatmul.bf16.gmra.mxu0 %v144
    %v1199 = vpop.f32.mrf.mxu0
    %v1200 = vadd.f32 %v1187, %v1199
    %v1201 = vpop.f32.mrf.mxu0
    %1202 = vdwg.mxu0
    %v1203 = vsel %vm80, %v1044, 0.0
    %v1204 = vrot.slane %v1203, 4
    %v1205 = vadd.f32 %v1203, %v1204
    %v1206 = vrot.slane %v1205, 2
    %v1207 = vadd.f32 %v1205, %v1206
    %v1208 = vrot.slane %v1207, 1
    %v1209 = vadd.f32 %v1207, %v1208
    %v1210 = vsel %vm80, %v1096, 0.0
    %v1211 = vrot.slane %v1210, 4
    %v1212 = vadd.f32 %v1210, %v1211
    %v1213 = vrot.slane %v1212, 2
    %v1214 = vadd.f32 %v1212, %v1213
    %v1215 = vrot.slane %v1214, 1
    %v1216 = vadd.f32 %v1214, %v1215
    %v1217 = vsel %vm80, %v1148, 0.0
    %v1218 = vrot.slane %v1217, 4
    %v1219 = vadd.f32 %v1217, %v1218
    %v1220 = vrot.slane %v1219, 2
    %v1221 = vadd.f32 %v1219, %v1220
    %v1222 = vrot.slane %v1221, 1
    %v1223 = vadd.f32 %v1221, %v1222
    %v1224 = vsel %vm80, %v1200, 0.0
    %v1225 = vrot.slane %v1224, 4
    %v1226 = vadd.f32 %v1224, %v1225
    %v1227 = vrot.slane %v1226, 2
    %v1228 = vadd.f32 %v1226, %v1227
    %v1229 = vrot.slane %v1228, 1
    %v1230 = vadd.f32 %v1228, %v1229
    %v1231 = vmul.f32 %v1044, %v1044
    %v1232 = vmul.f32 %v1096, %v1096
    %v1233 = vmul.f32 %v1148, %v1148
    %v1234 = vmul.f32 %v1200, %v1200
    %v1235 = vsel %vm80, %v1231, 0.0
    %v1236 = vrot.slane %v1235, 4
    %v1237 = vadd.f32 %v1235, %v1236
    %v1238 = vrot.slane %v1237, 2
    %v1239 = vadd.f32 %v1237, %v1238
    %v1240 = vrot.slane %v1239, 1
    %v1241 = vadd.f32 %v1239, %v1240
    %v1242 = vsel %vm80, %v1232, 0.0
    %v1243 = vrot.slane %v1242, 4
    %v1244 = vadd.f32 %v1242, %v1243
    %v1245 = vrot.slane %v1244, 2
    %v1246 = vadd.f32 %v1244, %v1245
    %v1247 = vrot.slane %v1246, 1
    %v1248 = vadd.f32 %v1246, %v1247
    %v1249 = vsel %vm80, %v1233, 0.0
    %v1250 = vrot.slane %v1249, 4
    %v1251 = vadd.f32 %v1249, %v1250
    %v1252 = vrot.slane %v1251, 2
    %v1253 = vadd.f32 %v1251, %v1252
    %v1254 = vrot.slane %v1253, 1
    %v1255 = vadd.f32 %v1253, %v1254
    %v1256 = vsel %vm80, %v1234, 0.0
    %v1257 = vrot.slane %v1256, 4
    %v1258 = vadd.f32 %v1256, %v1257
    %v1259 = vrot.slane %v1258, 2
    %v1260 = vadd.f32 %v1258, %v1259
    %v1261 = vrot.slane %v1260, 1
    %v1262 = vadd.f32 %v1260, %v1261
    %v1263 = vld [vmem:[%s4] sm:$0xff]
    %v1264 = vld [vmem:[%s4 + $0x8] sm:$0xff]
    %v1265 = vld [vmem:[%s4 + $0x10] sm:$0xff]
    %v1266 = vld [vmem:[%s4 + $0x18] sm:$0xff]
    %v1267 = vld [vmem:[%s4 + $0x20] sm:$0xff]
    %v1268 = vld [vmem:[%s4 + $0x28] sm:$0xff]
    %v1269 = vld [vmem:[%s4 + $0x30] sm:$0xff]
    %v1270 = vld [vmem:[%s4 + $0x38] sm:$0xff]
    %v1271 = vld [vmem:[%s4 + $0x40] sm:$0xff]
    %v1272 = vld [vmem:[%s4 + $0x48] sm:$0xff]
    %v1273 = vld [vmem:[%s4 + $0x50] sm:$0xff]
    %v1274 = vld [vmem:[%s4 + $0x58] sm:$0xff]
    %v1275 = vld [vmem:[%s4 + $0x60] sm:$0xff]
    %v1276 = vld [vmem:[%s4 + $0x68] sm:$0xff]
    %v1277 = vld [vmem:[%s4 + $0x70] sm:$0xff]
    %v1278 = vld [vmem:[%s4 + $0x78] sm:$0xff]
    %v1279 = vld [vmem:[%s4 + $0x80] sm:$0xff]
    %v1280 = vld [vmem:[%s4 + $0x88] sm:$0xff]
    %v1281 = vld [vmem:[%s4 + $0x90] sm:$0xff]
    %v1282 = vld [vmem:[%s4 + $0x98] sm:$0xff]
    %v1283 = vld [vmem:[%s4 + $0xa0] sm:$0xff]
    %v1284 = vld [vmem:[%s4 + $0xa8] sm:$0xff]
    %v1285 = vld [vmem:[%s4 + $0xb0] sm:$0xff]
    %v1286 = vld [vmem:[%s4 + $0xb8] sm:$0xff]
    %v1287 = vld [vmem:[%s4 + $0xc0] sm:$0xff]
    %v1288 = vld [vmem:[%s4 + $0xc8] sm:$0xff]
    %v1289 = vld [vmem:[%s4 + $0xd0] sm:$0xff]
    %v1290 = vld [vmem:[%s4 + $0xd8] sm:$0xff]
    %v1291 = vld [vmem:[%s4 + $0xe0] sm:$0xff]
    %v1292 = vld [vmem:[%s4 + $0xe8] sm:$0xff]
    %v1293 = vld [vmem:[%s4 + $0xf0] sm:$0xff]
    %v1294 = vld [vmem:[%s4 + $0xf8] sm:$0xff]
    %v1295 = vld [vmem:[%s4 + $0x100] sm:$0xff]
    %v1296 = vld [vmem:[%s4 + $0x108] sm:$0xff]
    %v1297 = vld [vmem:[%s4 + $0x110] sm:$0xff]
    %v1298 = vld [vmem:[%s4 + $0x118] sm:$0xff]
    %v1299 = vld [vmem:[%s4 + $0x120] sm:$0xff]
    %v1300 = vld [vmem:[%s4 + $0x128] sm:$0xff]
    %v1301 = vld [vmem:[%s4 + $0x130] sm:$0xff]
    %v1302 = vld [vmem:[%s4 + $0x138] sm:$0xff]
    %v1303 = vld [vmem:[%s4 + $0x140] sm:$0xff]
    %v1304 = vld [vmem:[%s4 + $0x148] sm:$0xff]
    %v1305 = vld [vmem:[%s4 + $0x150] sm:$0xff]
    %v1306 = vld [vmem:[%s4 + $0x158] sm:$0xff]
    %v1307 = vld [vmem:[%s4 + $0x160] sm:$0xff]
    %v1308 = vld [vmem:[%s4 + $0x168] sm:$0xff]
    %v1309 = vld [vmem:[%s4 + $0x170] sm:$0xff]
    %v1310 = vld [vmem:[%s4 + $0x178] sm:$0xff]
    %v1311 = vld [vmem:[%s4 + $0x180] sm:$0xff]
    %v1312 = vld [vmem:[%s4 + $0x188] sm:$0xff]
    %v1313 = vld [vmem:[%s4 + $0x190] sm:$0xff]
    %v1314 = vld [vmem:[%s4 + $0x198] sm:$0xff]
    %v1315 = vld [vmem:[%s4 + $0x1a0] sm:$0xff]
    %v1316 = vld [vmem:[%s4 + $0x1a8] sm:$0xff]
    %v1317 = vld [vmem:[%s4 + $0x1b0] sm:$0xff]
    %v1318 = vld [vmem:[%s4 + $0x1b8] sm:$0xff]
    %v1319 = vld [vmem:[%s4 + $0x1c0] sm:$0xff]
    %v1320 = vld [vmem:[%s4 + $0x1c8] sm:$0xff]
    %v1321 = vld [vmem:[%s4 + $0x1d0] sm:$0xff]
    %v1322 = vld [vmem:[%s4 + $0x1d8] sm:$0xff]
    %v1323 = vld [vmem:[%s4 + $0x1e0] sm:$0xff]
    %v1324 = vld [vmem:[%s4 + $0x1e8] sm:$0xff]
    %v1325 = vld [vmem:[%s4 + $0x1f0] sm:$0xff]
    %v1326 = vld [vmem:[%s4 + $0x1f8] sm:$0xff]
    %1327 = vmatpush.msra.mxu0 %v1278
    %1328 = vmatpush.msra.mxu0 %v1277
    %1329 = vmatpush.msra.mxu0 %v1276
    %1330 = vmatpush.msra.mxu0 %v1275
    %1331 = vmatpush.msra.mxu0 %v1274
    %1332 = vmatpush.msra.mxu0 %v1273
    %1333 = vmatpush.msra.mxu0 %v1272
    %1334 = vmatpush.msra.mxu0 %v1271
    %1335 = vmatpush.msra.mxu0 %v1270
    %1336 = vmatpush.msra.mxu0 %v1269
    %1337 = vmatpush.msra.mxu0 %v1268
    %1338 = vmatpush.msra.mxu0 %v1267
    %1339 = vmatpush.msra.mxu0 %v1266
    %1340 = vmatpush.msra.mxu0 %v1265
    %1341 = vmatpush.msra.mxu0 %v1264
    %1342 = vmatpush.msra.mxu0 %v1263
    %1343 = vmatmul.f32.gmra.mxu0 %v1209
    %v1344 = vpop.f32.mrf.mxu0
    %v1345 = vadd.f32 0.0, %v1344
    %1346 = vdwg.mxu0
    %1347 = vmatpush.msra.mxu0 %v1294
    %1348 = vmatpush.msra.mxu0 %v1293
    %1349 = vmatpush.msra.mxu0 %v1292
    %1350 = vmatpush.msra.mxu0 %v1291
    %1351 = vmatpush.msra.mxu0 %v1290
    %1352 = vmatpush.msra.mxu0 %v1289
    %1353 = vmatpush.msra.mxu0 %v1288
    %1354 = vmatpush.msra.mxu0 %v1287
    %1355 = vmatpush.msra.mxu0 %v1286
    %1356 = vmatpush.msra.mxu0 %v1285
    %1357 = vmatpush.msra.mxu0 %v1284
    %1358 = vmatpush.msra.mxu0 %v1283
    %1359 = vmatpush.msra.mxu0 %v1282
    %1360 = vmatpush.msra.mxu0 %v1281
    %1361 = vmatpush.msra.mxu0 %v1280
    %1362 = vmatpush.msra.mxu0 %v1279
    %1363 = vmatmul.f32.gmra.mxu0 %v1216
    %v1364 = vpop.f32.mrf.mxu0
    %v1365 = vadd.f32 %v1345, %v1364
    %1366 = vdwg.mxu0
    %1367 = vmatpush.msra.mxu0 %v1310
    %1368 = vmatpush.msra.mxu0 %v1309
    %1369 = vmatpush.msra.mxu0 %v1308
    %1370 = vmatpush.msra.mxu0 %v1307
    %1371 = vmatpush.msra.mxu0 %v1306
    %1372 = vmatpush.msra.mxu0 %v1305
    %1373 = vmatpush.msra.mxu0 %v1304
    %1374 = vmatpush.msra.mxu0 %v1303
    %1375 = vmatpush.msra.mxu0 %v1302
    %1376 = vmatpush.msra.mxu0 %v1301
    %1377 = vmatpush.msra.mxu0 %v1300
    %1378 = vmatpush.msra.mxu0 %v1299
    %1379 = vmatpush.msra.mxu0 %v1298
    %1380 = vmatpush.msra.mxu0 %v1297
    %1381 = vmatpush.msra.mxu0 %v1296
    %1382 = vmatpush.msra.mxu0 %v1295
    %1383 = vmatmul.f32.gmra.mxu0 %v1223
    %v1384 = vpop.f32.mrf.mxu0
    %v1385 = vadd.f32 %v1365, %v1384
    %1386 = vdwg.mxu0
    %1387 = vmatpush.msra.mxu0 %v1326
    %1388 = vmatpush.msra.mxu0 %v1325
    %1389 = vmatpush.msra.mxu0 %v1324
    %1390 = vmatpush.msra.mxu0 %v1323
    %1391 = vmatpush.msra.mxu0 %v1322
    %1392 = vmatpush.msra.mxu0 %v1321
    %1393 = vmatpush.msra.mxu0 %v1320
    %1394 = vmatpush.msra.mxu0 %v1319
    %1395 = vmatpush.msra.mxu0 %v1318
    %1396 = vmatpush.msra.mxu0 %v1317
    %1397 = vmatpush.msra.mxu0 %v1316
    %1398 = vmatpush.msra.mxu0 %v1315
    %1399 = vmatpush.msra.mxu0 %v1314
    %1400 = vmatpush.msra.mxu0 %v1313
    %1401 = vmatpush.msra.mxu0 %v1312
    %1402 = vmatpush.msra.mxu0 %v1311
    %1403 = vmatmul.f32.gmra.mxu0 %v1230
    %v1404 = vpop.f32.mrf.mxu0
    %v1405 = vadd.f32 %v1385, %v1404
    %1406 = vdwg.mxu0
    %v1407 = vmul.f32 %v1405, 0.03125
    %1408 = vmatpush.msra.mxu0 %v1278
    %1409 = vmatpush.msra.mxu0 %v1277
    %1410 = vmatpush.msra.mxu0 %v1276
    %1411 = vmatpush.msra.mxu0 %v1275
    %1412 = vmatpush.msra.mxu0 %v1274
    %1413 = vmatpush.msra.mxu0 %v1273
    %1414 = vmatpush.msra.mxu0 %v1272
    %1415 = vmatpush.msra.mxu0 %v1271
    %1416 = vmatpush.msra.mxu0 %v1270
    %1417 = vmatpush.msra.mxu0 %v1269
    %1418 = vmatpush.msra.mxu0 %v1268
    %1419 = vmatpush.msra.mxu0 %v1267
    %1420 = vmatpush.msra.mxu0 %v1266
    %1421 = vmatpush.msra.mxu0 %v1265
    %1422 = vmatpush.msra.mxu0 %v1264
    %1423 = vmatpush.msra.mxu0 %v1263
    %1424 = vmatmul.f32.gmra.mxu0 %v1241
    %v1425 = vpop.f32.mrf.mxu0
    %v1426 = vadd.f32 0.0, %v1425
    %1427 = vdwg.mxu0
    %1428 = vmatpush.msra.mxu0 %v1294
    %1429 = vmatpush.msra.mxu0 %v1293
    %1430 = vmatpush.msra.mxu0 %v1292
    %1431 = vmatpush.msra.mxu0 %v1291
    %1432 = vmatpush.msra.mxu0 %v1290
    %1433 = vmatpush.msra.mxu0 %v1289
    %1434 = vmatpush.msra.mxu0 %v1288
    %1435 = vmatpush.msra.mxu0 %v1287
    %1436 = vmatpush.msra.mxu0 %v1286
    %1437 = vmatpush.msra.mxu0 %v1285
    %1438 = vmatpush.msra.mxu0 %v1284
    %1439 = vmatpush.msra.mxu0 %v1283
    %1440 = vmatpush.msra.mxu0 %v1282
    %1441 = vmatpush.msra.mxu0 %v1281
    %1442 = vmatpush.msra.mxu0 %v1280
    %1443 = vmatpush.msra.mxu0 %v1279
    %1444 = vmatmul.f32.gmra.mxu0 %v1248
    %v1445 = vpop.f32.mrf.mxu0
    %v1446 = vadd.f32 %v1426, %v1445
    %1447 = vdwg.mxu0
    %1448 = vmatpush.msra.mxu0 %v1310
    %1449 = vmatpush.msra.mxu0 %v1309
    %1450 = vmatpush.msra.mxu0 %v1308
    %1451 = vmatpush.msra.mxu0 %v1307
    %1452 = vmatpush.msra.mxu0 %v1306
    %1453 = vmatpush.msra.mxu0 %v1305
    %1454 = vmatpush.msra.mxu0 %v1304
    %1455 = vmatpush.msra.mxu0 %v1303
    %1456 = vmatpush.msra.mxu0 %v1302
    %1457 = vmatpush.msra.mxu0 %v1301
    %1458 = vmatpush.msra.mxu0 %v1300
    %1459 = vmatpush.msra.mxu0 %v1299
    %1460 = vmatpush.msra.mxu0 %v1298
    %1461 = vmatpush.msra.mxu0 %v1297
    %1462 = vmatpush.msra.mxu0 %v1296
    %1463 = vmatpush.msra.mxu0 %v1295
    %1464 = vmatmul.f32.gmra.mxu0 %v1255
    %v1465 = vpop.f32.mrf.mxu0
    %v1466 = vadd.f32 %v1446, %v1465
    %1467 = vdwg.mxu0
    %1468 = vmatpush.msra.mxu0 %v1326
    %1469 = vmatpush.msra.mxu0 %v1325
    %1470 = vmatpush.msra.mxu0 %v1324
    %1471 = vmatpush.msra.mxu0 %v1323
    %1472 = vmatpush.msra.mxu0 %v1322
    %1473 = vmatpush.msra.mxu0 %v1321
    %1474 = vmatpush.msra.mxu0 %v1320
    %1475 = vmatpush.msra.mxu0 %v1319
    %1476 = vmatpush.msra.mxu0 %v1318
    %1477 = vmatpush.msra.mxu0 %v1317
    %1478 = vmatpush.msra.mxu0 %v1316
    %1479 = vmatpush.msra.mxu0 %v1315
    %1480 = vmatpush.msra.mxu0 %v1314
    %1481 = vmatpush.msra.mxu0 %v1313
    %1482 = vmatpush.msra.mxu0 %v1312
    %1483 = vmatpush.msra.mxu0 %v1311
    %1484 = vmatmul.f32.gmra.mxu0 %v1262
    %v1485 = vpop.f32.mrf.mxu0
    %v1486 = vadd.f32 %v1466, %v1485
    %1487 = vdwg.mxu0
    %v1488 = vmul.f32 %v1486, 0.03125
    %v1489 = vmul.f32 %v1407, %v1407
    %v1490 = vsub.f32 %v1488, %v1489
    %v1491 = vmax.f32 %v1490, 0.0
    %v1492 = vadd.f32 %v1491, 1e-05
    %v1493 = vrsqrt.pop %v1492
    %v1494 = vmul.f32 %v1493, %v1492
    %v1495 = vmul.f32 %v1494, %v1493
    %v1496 = vmul.f32 0.5, %v1495
    %v1497 = vsub.f32 1.5, %v1496
    %v1498 = vmul.f32 %v1493, %v1497
    %vm1499 = vweird.f32 %v1492
    %vm1500 = vweird.f32 %v1493
    %vm1501 = vmor %vm1499, %vm1500
    %v1502 = vsel %vm1501, %v1493, %v1498
    %v1503 = vld [vmem:[%s6] sm:$0x1]
    %v1504 = vmul.f32 %v1503, %v1502
    %v1505 = vld [vmem:[%s7] sm:$0x1]
    %v1506 = vmul.f32 %v1407, %v1504
    %v1507 = vsub.f32 %v1505, %v1506
    %v1508 = vld [vmem:[%s5] sm:$0xff]
    %v1509 = vld [vmem:[%s5 + $0x8] sm:$0xff]
    %v1510 = vld [vmem:[%s5 + $0x10] sm:$0xff]
    %v1511 = vld [vmem:[%s5 + $0x18] sm:$0xff]
    %v1512 = vld [vmem:[%s5 + $0x20] sm:$0xff]
    %v1513 = vld [vmem:[%s5 + $0x28] sm:$0xff]
    %v1514 = vld [vmem:[%s5 + $0x30] sm:$0xff]
    %v1515 = vld [vmem:[%s5 + $0x38] sm:$0xff]
    %v1516 = vld [vmem:[%s5 + $0x40] sm:$0xff]
    %v1517 = vld [vmem:[%s5 + $0x48] sm:$0xff]
    %v1518 = vld [vmem:[%s5 + $0x50] sm:$0xff]
    %v1519 = vld [vmem:[%s5 + $0x58] sm:$0xff]
    %v1520 = vld [vmem:[%s5 + $0x60] sm:$0xff]
    %v1521 = vld [vmem:[%s5 + $0x68] sm:$0xff]
    %v1522 = vld [vmem:[%s5 + $0x70] sm:$0xff]
    %v1523 = vld [vmem:[%s5 + $0x78] sm:$0xff]
    %vm1524 = vcmask 261120
    %v1526 = vsel %vm1524, %v1504, 0
    %1528 = vmatpush.msra.mxu0 0.0
    %1529 = vmatpush.msra.mxu0 0.0
    %1530 = vmatpush.msra.mxu0 0.0
    %1531 = vmatpush.msra.mxu0 0.0
    %1532 = vmatpush.msra.mxu0 0.0
    %1533 = vmatpush.msra.mxu0 0.0
    %1534 = vmatpush.msra.mxu0 0.0
    %1535 = vmatpush.msra.mxu0 0.0
    %1536 = vmatpush.msra.mxu0 0.0
    %1537 = vmatpush.msra.mxu0 0.0
    %1538 = vmatpush.msra.mxu0 0.0
    %1539 = vmatpush.msra.mxu0 0.0
    %1540 = vmatpush.msra.mxu0 %v1520
    %1541 = vmatpush.msra.mxu0 %v1516
    %1542 = vmatpush.msra.mxu0 %v1512
    %1543 = vmatpush.msra.mxu0 %v1508
    %1544 = vmatmul.f32.gmra.mxu0 %v1526
    %v1545 = vpop.f32.mrf.mxu0
    %v1546 = vadd.f32 0.0, %v1545
    %1547 = vdwg.mxu0
    %1548 = vmatpush.msra.mxu0 0.0
    %1549 = vmatpush.msra.mxu0 0.0
    %1550 = vmatpush.msra.mxu0 0.0
    %1551 = vmatpush.msra.mxu0 0.0
    %1552 = vmatpush.msra.mxu0 0.0
    %1553 = vmatpush.msra.mxu0 0.0
    %1554 = vmatpush.msra.mxu0 0.0
    %1555 = vmatpush.msra.mxu0 0.0
    %1556 = vmatpush.msra.mxu0 0.0
    %1557 = vmatpush.msra.mxu0 0.0
    %1558 = vmatpush.msra.mxu0 0.0
    %1559 = vmatpush.msra.mxu0 0.0
    %1560 = vmatpush.msra.mxu0 %v1521
    %1561 = vmatpush.msra.mxu0 %v1517
    %1562 = vmatpush.msra.mxu0 %v1513
    %1563 = vmatpush.msra.mxu0 %v1509
    %1564 = vmatmul.f32.gmra.mxu0 %v1526
    %v1565 = vpop.f32.mrf.mxu0
    %v1566 = vadd.f32 0.0, %v1565
    %1567 = vdwg.mxu0
    %1568 = vmatpush.msra.mxu0 0.0
    %1569 = vmatpush.msra.mxu0 0.0
    %1570 = vmatpush.msra.mxu0 0.0
    %1571 = vmatpush.msra.mxu0 0.0
    %1572 = vmatpush.msra.mxu0 0.0
    %1573 = vmatpush.msra.mxu0 0.0
    %1574 = vmatpush.msra.mxu0 0.0
    %1575 = vmatpush.msra.mxu0 0.0
    %1576 = vmatpush.msra.mxu0 0.0
    %1577 = vmatpush.msra.mxu0 0.0
    %1578 = vmatpush.msra.mxu0 0.0
    %1579 = vmatpush.msra.mxu0 0.0
    %1580 = vmatpush.msra.mxu0 %v1522
    %1581 = vmatpush.msra.mxu0 %v1518
    %1582 = vmatpush.msra.mxu0 %v1514
    %1583 = vmatpush.msra.mxu0 %v1510
    %1584 = vmatmul.f32.gmra.mxu0 %v1526
    %v1585 = vpop.f32.mrf.mxu0
    %v1586 = vadd.f32 0.0, %v1585
    %1587 = vdwg.mxu0
    %1588 = vmatpush.msra.mxu0 0.0
    %1589 = vmatpush.msra.mxu0 0.0
    %1590 = vmatpush.msra.mxu0 0.0
    %1591 = vmatpush.msra.mxu0 0.0
    %1592 = vmatpush.msra.mxu0 0.0
    %1593 = vmatpush.msra.mxu0 0.0
    %1594 = vmatpush.msra.mxu0 0.0
    %1595 = vmatpush.msra.mxu0 0.0
    %1596 = vmatpush.msra.mxu0 0.0
    %1597 = vmatpush.msra.mxu0 0.0
    %1598 = vmatpush.msra.mxu0 0.0
    %1599 = vmatpush.msra.mxu0 0.0
    %1600 = vmatpush.msra.mxu0 %v1523
    %1601 = vmatpush.msra.mxu0 %v1519
    %1602 = vmatpush.msra.mxu0 %v1515
    %1603 = vmatpush.msra.mxu0 %v1511
    %1604 = vmatmul.f32.gmra.mxu0 %v1526
    %v1605 = vpop.f32.mrf.mxu0
    %v1606 = vadd.f32 0.0, %v1605
    %1607 = vdwg.mxu0
    %v1609 = vsel %vm1524, %v1507, 0
    %1611 = vmatpush.msra.mxu0 0.0
    %1612 = vmatpush.msra.mxu0 0.0
    %1613 = vmatpush.msra.mxu0 0.0
    %1614 = vmatpush.msra.mxu0 0.0
    %1615 = vmatpush.msra.mxu0 0.0
    %1616 = vmatpush.msra.mxu0 0.0
    %1617 = vmatpush.msra.mxu0 0.0
    %1618 = vmatpush.msra.mxu0 0.0
    %1619 = vmatpush.msra.mxu0 0.0
    %1620 = vmatpush.msra.mxu0 0.0
    %1621 = vmatpush.msra.mxu0 0.0
    %1622 = vmatpush.msra.mxu0 0.0
    %1623 = vmatpush.msra.mxu0 %v1520
    %1624 = vmatpush.msra.mxu0 %v1516
    %1625 = vmatpush.msra.mxu0 %v1512
    %1626 = vmatpush.msra.mxu0 %v1508
    %1627 = vmatmul.f32.gmra.mxu0 %v1609
    %v1628 = vpop.f32.mrf.mxu0
    %v1629 = vadd.f32 0.0, %v1628
    %1630 = vdwg.mxu0
    %1631 = vmatpush.msra.mxu0 0.0
    %1632 = vmatpush.msra.mxu0 0.0
    %1633 = vmatpush.msra.mxu0 0.0
    %1634 = vmatpush.msra.mxu0 0.0
    %1635 = vmatpush.msra.mxu0 0.0
    %1636 = vmatpush.msra.mxu0 0.0
    %1637 = vmatpush.msra.mxu0 0.0
    %1638 = vmatpush.msra.mxu0 0.0
    %1639 = vmatpush.msra.mxu0 0.0
    %1640 = vmatpush.msra.mxu0 0.0
    %1641 = vmatpush.msra.mxu0 0.0
    %1642 = vmatpush.msra.mxu0 0.0
    %1643 = vmatpush.msra.mxu0 %v1521
    %1644 = vmatpush.msra.mxu0 %v1517
    %1645 = vmatpush.msra.mxu0 %v1513
    %1646 = vmatpush.msra.mxu0 %v1509
    %1647 = vmatmul.f32.gmra.mxu0 %v1609
    %v1648 = vpop.f32.mrf.mxu0
    %v1649 = vadd.f32 0.0, %v1648
    %1650 = vdwg.mxu0
    %1651 = vmatpush.msra.mxu0 0.0
    %1652 = vmatpush.msra.mxu0 0.0
    %1653 = vmatpush.msra.mxu0 0.0
    %1654 = vmatpush.msra.mxu0 0.0
    %1655 = vmatpush.msra.mxu0 0.0
    %1656 = vmatpush.msra.mxu0 0.0
    %1657 = vmatpush.msra.mxu0 0.0
    %1658 = vmatpush.msra.mxu0 0.0
    %1659 = vmatpush.msra.mxu0 0.0
    %1660 = vmatpush.msra.mxu0 0.0
    %1661 = vmatpush.msra.mxu0 0.0
    %1662 = vmatpush.msra.mxu0 0.0
    %1663 = vmatpush.msra.mxu0 %v1522
    %1664 = vmatpush.msra.mxu0 %v1518
    %1665 = vmatpush.msra.mxu0 %v1514
    %1666 = vmatpush.msra.mxu0 %v1510
    %1667 = vmatmul.f32.gmra.mxu0 %v1609
    %v1668 = vpop.f32.mrf.mxu0
    %v1669 = vadd.f32 0.0, %v1668
    %1670 = vdwg.mxu0
    %1671 = vmatpush.msra.mxu0 0.0
    %1672 = vmatpush.msra.mxu0 0.0
    %1673 = vmatpush.msra.mxu0 0.0
    %1674 = vmatpush.msra.mxu0 0.0
    %1675 = vmatpush.msra.mxu0 0.0
    %1676 = vmatpush.msra.mxu0 0.0
    %1677 = vmatpush.msra.mxu0 0.0
    %1678 = vmatpush.msra.mxu0 0.0
    %1679 = vmatpush.msra.mxu0 0.0
    %1680 = vmatpush.msra.mxu0 0.0
    %1681 = vmatpush.msra.mxu0 0.0
    %1682 = vmatpush.msra.mxu0 0.0
    %1683 = vmatpush.msra.mxu0 %v1523
    %1684 = vmatpush.msra.mxu0 %v1519
    %1685 = vmatpush.msra.mxu0 %v1515
    %1686 = vmatpush.msra.mxu0 %v1511
    %1687 = vmatmul.f32.gmra.mxu0 %v1609
    %v1688 = vpop.f32.mrf.mxu0
    %v1689 = vadd.f32 0.0, %v1688
    %1690 = vdwg.mxu0
    %v1691 = vperm.slane %v1546, 0
    %v1692 = vperm.slane %v1566, 0
    %v1693 = vperm.slane %v1586, 0
    %v1694 = vperm.slane %v1606, 0
    %v1695 = vmul.f32 %v1044, %v1691
    %v1696 = vmul.f32 %v1096, %v1692
    %v1697 = vmul.f32 %v1148, %v1693
    %v1698 = vmul.f32 %v1200, %v1694
    %v1699 = vperm.slane %v1629, 0
    %v1700 = vperm.slane %v1649, 0
    %v1701 = vperm.slane %v1669, 0
    %v1702 = vperm.slane %v1689, 0
    %v1703 = vadd.f32 %v1695, %v1699
    %v1704 = vadd.f32 %v1696, %v1700
    %v1705 = vadd.f32 %v1697, %v1701
    %v1706 = vadd.f32 %v1698, %v1702
    %vm1707 = vcmp.gt.f32.partialorder %v1703, 0.0
    %vm1708 = vcmp.gt.f32.partialorder %v1704, 0.0
    %vm1709 = vcmp.gt.f32.partialorder %v1705, 0.0
    %vm1710 = vcmp.gt.f32.partialorder %v1706, 0.0
    %v1711 = vmul.f32 %v1703, 0.2
    %v1712 = vmul.f32 %v1704, 0.2
    %v1713 = vmul.f32 %v1705, 0.2
    %v1714 = vmul.f32 %v1706, 0.2
    %v1715 = vsel %vm1707, %v1703, %v1711
    %v1716 = vsel %vm1708, %v1704, %v1712
    %v1717 = vsel %vm1709, %v1705, %v1713
    %v1718 = vsel %vm1710, %v1706, %v1714
    %v1719 = vld [vmem:[%s8] sm:$0xf]
    %v1721 = vperm.slane %v1719, 0
    %v1722 = vperm.slane %v1719, 1
    %v1723 = vperm.slane %v1719, 2
    %v1724 = vperm.slane %v1719, 3
    %v1729 = vmul.f32 %v1715, %v1721
    %v1730 = vmul.f32 %v1716, %v1722
    %v1731 = vmul.f32 %v1717, %v1723
    %v1732 = vmul.f32 %v1718, %v1724
    %v1733 = vsel %vm80, %v1729, 0.0
    %v1734 = vsel %vm80, %v1730, 0.0
    %v1735 = vadd.f32 %v1733, %v1734
    %v1736 = vsel %vm80, %v1731, 0.0
    %v1737 = vadd.f32 %v1735, %v1736
    %v1738 = vsel %vm80, %v1732, 0.0
    %v1739 = vadd.f32 %v1737, %v1738
    %1740 = vadd.xlane.f32.xlu0 %v1739
    %v1741 = vpop.xlane.xlu0 %1740
    %s1742 = sld [smem:[#allocation5]]
    %v1743 = vstv %s1742
    %v1744 = vadd.f32 %v1741, %v1743
    %v1745 = vxor.u32 %v1744, 2147483648
    %v1746 = vmul.f32 %v1745, 1.442695
    %v1747 = vpow.pop %v1746
    %v1748 = vadd.f32 %v1747, 1.0
    %v1749 = vrcp.pop %v1748
    %v1750 = vmul.f32 %v1748, %v1749
    %v1751 = vsub.f32 1.0, %v1750
    %v1752 = vmul.f32 %v1749, %v1751
    %v1753 = vadd.f32 %v1749, %v1752
    %vm1754 = vweird.f32 %v1748
    %vm1755 = vweird.f32 %v1749
    %vm1756 = vmor %vm1754, %vm1755
    %v1757 = vsel %vm1756, %v1749, %v1753
    %v1758 = vand.u32 2147483647, %v1748
    %vm1759 = vcmp.eq.f32.partialorder %v1758, 8.507059e+37
    %v1760 = vand.u32 %v1748, 2147483648
    %v1761 = vor.u32 1.1754944e-38, %v1760
    %v1762 = vsel %vm1759, %v1761, %v1757
    %v1763 = vmul.f32 1.0, %v1762
    %1764 = vst.msk [vmem:[%s11] sm:$0x3] %vm129, %v1763
    // Predicated region
    $region54: #{d_net64_heads.1} parent=1 // pred_check
      _
    $region55: #{d_net64_heads.1} parent=1 // pred_check_branch
      %1766 = sbr.rel (0) target = $region57
    $region56: #{d_net64_heads.1} parent=1 // pred_region
      _
    $region57: #{d_net64_heads.1} parent=1 // pred_fallthru
      _
    // Predicated region
    $region58: #{d_net64_heads.1} parent=1 // pred_check
      _
    $region59: #{d_net64_heads.1} parent=1 // pred_check_branch
      %1768 = sbr.rel (0) target = $region61
    $region60: #{d_net64_heads.1} parent=1 // pred_region
      _
    $region61: #{d_net64_heads.1} parent=1 // pred_fallthru
      _
    // Predicated region
    $region62: #{d_net64_heads.1} parent=1 // pred_check
      _
    $region63: #{d_net64_heads.1} parent=1 // pred_check_branch
      %1770 = sbr.rel (0) target = $region65
    $region64: #{d_net64_heads.1} parent=1 // pred_region
      _
    $region65: #{d_net64_heads.1} parent=1 // pred_fallthru
      _
    // Predicated region
    $region66: #{d_net64_heads.1} parent=1 // pred_check
      _
    $region67: #{d_net64_heads.1} parent=1 // pred_check_branch
      %1772 = sbr.rel (0) target = $region69
    $region68: #{d_net64_heads.1} parent=1 // pred_region
      _
    $region69: #{d_net64_heads.1} parent=1 // pred_fallthru
      _
    %1773 = vsyncpa [#allocation3], 1
    %1774 = vsyncpa [#allocation4], 1

</llo_original>
